<compile_context>
chip_gen: v7x
topology: tpu7x:2x2x1
jax: 0.10.0
libtpu: 0.0.40
codegen_flags: <defaults>
</compile_context>

<pallas_src>
import jax
import jax.numpy as jnp
from jax.experimental import pallas as pl
from jax.experimental.pallas import tpu as pltpu


# --------------------------------------------------------------------------- #
# Kernel
# --------------------------------------------------------------------------- #
def vae_fwd_kernel(x_ref, eps_ref,
                   w_e0_ref, b_e0_ref,
                   w_ml_ref, b_ml_ref,        # fused [w_mu | w_lv], [b_mu | b_lv]
                   w_d0_ref, b_d0_ref,
                   w_last_ref, b_last_ref,
                   out_ref):                  # (tb, D_OUT_PAD) f32, lane-dense
    D_IN = x_ref.shape[1]
    D_LAT = eps_ref.shape[1]
    tb = out_ref.shape[0]
    d_pad = out_ref.shape[1] - (D_IN + 2 * D_LAT)

    # ---- encode (bf16 MXU operands, f32 accumulate, f32 elementwise on VPU/EUP) ----
    h = jnp.dot(x_ref[...], w_e0_ref[...],
                preferred_element_type=jnp.float32) + b_e0_ref[...]
    h = jnp.maximum(h, 0.0)                                    # ReLU in f32 (VPU)

    # fused mean|log_var matmul: one MXU pass, 2*D_LAT lane result
    ml = jnp.dot(h.astype(jnp.bfloat16), w_ml_ref[...],
                 preferred_element_type=jnp.float32) + b_ml_ref[...]
    mean = ml[:, :D_LAT]                                       # static lane slices
    log_var = ml[:, D_LAT:]

    # ---- reparametrization (matches reference: std = 0.5 * exp(log_var)) ----
    std = 0.5 * jnp.exp(log_var)                               # EUP exp, f32
    z = eps_ref[...] * std + mean                              # eps kept f32

    # ---- decode ----
    h2 = jnp.dot(z.astype(jnp.bfloat16), w_d0_ref[...],
                 preferred_element_type=jnp.float32) + b_d0_ref[...]
    h2 = jnp.maximum(h2, 0.0)                                  # ReLU in f32
    logits = jnp.dot(h2.astype(jnp.bfloat16), w_last_ref[...],
                     preferred_element_type=jnp.float32) + b_last_ref[...]
    recon = jax.nn.sigmoid(logits)                             # EUP, f32

    # single lane-dense, 128-aligned store: [recon | mean | log_var | 0-pad]
    pieces = [recon, ml]
    if d_pad > 0:
        pieces.append(jnp.zeros((tb, d_pad), jnp.float32))
    out_ref[...] = jnp.concatenate(pieces, axis=-1)


# --------------------------------------------------------------------------- #
# Tiling helpers
# --------------------------------------------------------------------------- #
def _round_up(v, m):
    return -(-v // m) * m


def _tensorcores_per_chip():
    """Only v7x has 2 TensorCores per chip; v5e/v6e have 1."""
    try:
        kind = jax.devices()[0].device_kind.lower()
    except Exception:
        return 1
    return 2 if "v7" in kind else 1


def _pick_batch_tile(B, per_row_bytes, num_tc):
    """Pick the largest batch tile that fits comfortably in VMEM.

    * 1-TC chips (v5e/v6e): a single grid step (tb == B) whenever it fits --
      the grid is a serial loop there, extra steps are pure per-step overhead.
    * 2-TC chips (v7x): exactly 2 parallel steps (tb ~= B/2) so both cores get
      one maximal tile.
    * tb is a multiple of 16 rows unless tb == B (bf16 sublane packing).
    """
    # Keep double-buffered batch tiles under ~24 MiB (fits every generation,
    # including v7x's 64 MiB physical VMEM, with room for intermediates).
    tb_cap = max(16, ((24 << 20) // (2 * per_row_bytes)) // 16 * 16)
    tb_cap = min(tb_cap, 8192)
    if num_tc >= 2 and B >= 32:
        tb = _round_up(-(-B // 2), 16)          # ceil(B/2) rounded up to 16
    else:
        tb = B
    return min(tb, tb_cap)


# --------------------------------------------------------------------------- #
# One-time parameter preprocessing (hoisted out of the forward hot path)
# --------------------------------------------------------------------------- #
def prepare_params(params):
    """bf16 weight casts + fusion of fc_mean/fc_log_var into one matmul operand.
    Call once (at init); reuse the result for every forward call."""
    return dict(
        w_e0=params["w_e0"].astype(jnp.bfloat16),
        b_e0=params["b_e0"],                                            # biases stay f32
        w_ml=jnp.concatenate([params["w_mu"], params["w_lv"]], axis=1).astype(jnp.bfloat16),
        b_ml=jnp.concatenate([params["b_mu"], params["b_lv"]], axis=1),
        w_d0=params["w_d0"].astype(jnp.bfloat16),
        b_d0=params["b_d0"],
        w_last=params["w_last"].astype(jnp.bfloat16),
        b_last=params["b_last"],
    )


# --------------------------------------------------------------------------- #
# Forward wrapper
# --------------------------------------------------------------------------- #
def net_vae_forward(x, eps, fused, *, tb=None):
    """x: (B, D_IN) f32, eps: (B, D_LAT) f32, fused: prepare_params(...) output.
    Returns (recon, mean, log_var), all f32."""
    B, D_IN = x.shape
    D_LAT = eps.shape[1]
    D_HID = fused["w_e0"].shape[1]
    D_OUT = D_IN + 2 * D_LAT
    D_OUT_PAD = _round_up(D_OUT, 128)          # unmasked full-lane output store

    # per-row HBM/VMEM traffic: bf16 x + f32 eps in, f32 padded fused out
    per_row_bytes = D_IN * 2 + D_LAT * 4 + D_OUT_PAD * 4
    num_tc = _tensorcores_per_chip()
    if tb is None:
        tb = _pick_batch_tile(B, per_row_bytes, num_tc)
    grid = (pl.cdiv(B, tb),)

    xb = x.astype(jnp.bfloat16)                # only the x tile travels as bf16

    def batch_spec(feat):
        return pl.BlockSpec((tb, feat), lambda i: (i, 0))

    def resident_spec(shape):
        # constant block index -> the pipeline does not re-DMA this block per step
        return pl.BlockSpec(shape, lambda i: (0, 0))

    in_specs = [
        batch_spec(D_IN),                      # x   (bf16)
        batch_spec(D_LAT),                     # eps (f32, full-precision noise)
        resident_spec(fused["w_e0"].shape),   resident_spec(fused["b_e0"].shape),
        resident_spec(fused["w_ml"].shape),   resident_spec(fused["b_ml"].shape),
        resident_spec(fused["w_d0"].shape),   resident_spec(fused["b_d0"].shape),
        resident_spec(fused["w_last"].shape), resident_spec(fused["b_last"].shape),
    ]
    out_specs = batch_spec(D_OUT_PAD)
    out_shape = jax.ShapeDtypeStruct((B, D_OUT_PAD), jnp.float32)

    # ---- VMEM budget: actual footprint + headroom (never the full physical VMEM) ----
    tile_bytes = 2 * tb * per_row_bytes                        # double-buffered I/O tiles
    weight_bytes = 2 * (2 * (D_IN * D_HID + D_HID * 2 * D_LAT + D_LAT * D_HID + D_HID * D_IN)
                        + 4 * (D_HID + 2 * D_LAT + D_HID + D_IN))
    interm_bytes = tb * (2 * D_HID + 3 * D_LAT + 2 * D_IN + 2 * D_OUT_PAD) * 4
    vmem_limit = int(min(max(tile_bytes + weight_bytes + interm_bytes + (4 << 20),
                             16 << 20),
                         48 << 20))

    # ---- advisory cost estimate for the XLA scheduler ----
    flops = 2 * B * (D_IN * D_HID + D_HID * 2 * D_LAT + D_LAT * D_HID + D_HID * D_IN)
    transcendentals = B * (D_LAT + D_IN)                       # exp + sigmoid
    bytes_accessed = B * per_row_bytes + weight_bytes // 2
    cost = pl.CostEstimate(flops=flops, transcendentals=transcendentals,
                           bytes_accessed=bytes_accessed)

    out = pl.pallas_call(
        vae_fwd_kernel,
        out_shape=out_shape,
        grid_spec=pltpu.PrefetchScalarGridSpec(
            num_scalar_prefetch=0,
            grid=grid,
            in_specs=in_specs,
            out_specs=out_specs,
        ),
        compiler_params=pltpu.CompilerParams(
            dimension_semantics=("parallel",),
            vmem_limit_bytes=vmem_limit,
        ),
        cost_estimate=cost,
    )(xb, eps,
      fused["w_e0"], fused["b_e0"], fused["w_ml"], fused["b_ml"],
      fused["w_d0"], fused["b_d0"], fused["w_last"], fused["b_last"])

    recon = out[:, :D_IN]
    mean = out[:, D_IN:D_IN + D_LAT]
    log_var = out[:, D_IN + D_LAT:D_OUT]
    return recon, mean, log_var


# --------------------------------------------------------------------------- #
# Synthetic init (mirrors torch.nn.Linear layout; weights stored (in, out))
# --------------------------------------------------------------------------- #
def init_params(key, module_features):
    d_in, d_hid, d_lat = module_features

    def linear(key, fan_in, fan_out):
        kw, kb = jax.random.split(key)
        bound = 1.0 / jnp.sqrt(fan_in)
        w = jax.random.uniform(kw, (fan_in, fan_out), jnp.float32, -bound, bound)
        b = jax.random.uniform(kb, (1, fan_out), jnp.float32, -bound, bound)
        return w, b

    keys = jax.random.split(key, 5)
    w_e0, b_e0 = linear(keys[0], d_in, d_hid)       # encoder Linear(d_in, d_hid)
    w_mu, b_mu = linear(keys[1], d_hid, d_lat)      # fc_mean
    w_lv, b_lv = linear(keys[2], d_hid, d_lat)      # fc_log_var
    w_d0, b_d0 = linear(keys[3], d_lat, d_hid)      # decoder[0] Linear(d_lat, d_hid)
    w_last, b_last = linear(keys[4], d_hid, d_in)   # fc_last Linear(d_hid, d_in)
    return dict(w_e0=w_e0, b_e0=b_e0, w_mu=w_mu, b_mu=b_mu,
                w_lv=w_lv, b_lv=b_lv, w_d0=w_d0, b_d0=b_d0,
                w_last=w_last, b_last=b_last)


if __name__ == "__main__":
    module_features = (64, 32, 16)   # (D_IN, D_HID, D_LAT)
    B = 256                          # v5e/v6e: tb=256, grid=1; v7x: tb=128, grid=2 (both TCs)

    root = jax.random.PRNGKey(0)
    k_param, k_x, k_eps = jax.random.split(root, 3)

    params = init_params(k_param, module_features)
    fused = prepare_params(params)   # one-time bf16 cast + mean|log_var fusion (hoisted)
    x = jax.random.normal(k_x, (B, module_features[0]), jnp.float32)
    # noise for the reparametrization trick (torch.randn equivalent, drawn outside kernel)
    eps = jax.random.normal(k_eps, (B, module_features[2]), jnp.float32)

    recon, mean, log_var = net_vae_forward(x, eps, fused)
    jax.block_until_ready((recon, mean, log_var))

    # ---- pure-JAX reference mirroring the kernel's bf16-operand / f32-accumulate math ----
    def mm(a, w):
        return jnp.dot(a.astype(jnp.bfloat16), w.astype(jnp.bfloat16),
                       preferred_element_type=jnp.float32)

    h_ref = jnp.maximum(mm(x, params["w_e0"]) + params["b_e0"], 0.0)
    mean_ref = mm(h_ref, params["w_mu"]) + params["b_mu"]
    lv_ref = mm(h_ref, params["w_lv"]) + params["b_lv"]
    z_ref = eps * (0.5 * jnp.exp(lv_ref)) + mean_ref
    h2_ref = jnp.maximum(mm(z_ref, params["w_d0"]) + params["b_d0"], 0.0)
    recon_ref = jax.nn.sigmoid(mm(h2_ref, params["w_last"]) + params["b_last"])

    assert jnp.allclose(recon, recon_ref, atol=2e-4, rtol=2e-4)
    assert jnp.allclose(mean, mean_ref, atol=2e-4, rtol=2e-4)
    assert jnp.allclose(log_var, lv_ref, atol=2e-4, rtol=2e-4)

    print("KERNEL_OK")
</pallas_src>

<mosaic_0001>
module attributes {stable_mosaic.version = 11 : i64} {
  func.func @vae_fwd_kernel(%arg0: i32, %arg1: memref<256x64xbf16, #tpu.memory_space<vmem>>, %arg2: memref<256x16xf32, #tpu.memory_space<vmem>>, %arg3: memref<64x32xbf16, #tpu.memory_space<vmem>>, %arg4: memref<1x32xf32, #tpu.memory_space<vmem>>, %arg5: memref<32x32xbf16, #tpu.memory_space<vmem>>, %arg6: memref<1x32xf32, #tpu.memory_space<vmem>>, %arg7: memref<16x32xbf16, #tpu.memory_space<vmem>>, %arg8: memref<1x32xf32, #tpu.memory_space<vmem>>, %arg9: memref<32x64xbf16, #tpu.memory_space<vmem>>, %arg10: memref<1x64xf32, #tpu.memory_space<vmem>>, %arg11: memref<256x128xf32, #tpu.memory_space<vmem>>) attributes {dimension_semantics = [#tpu.dimension_semantics<parallel>], iteration_bounds = array<i64: 1>, scalar_prefetch = 0 : i64, scratch_operands = 0 : i64, tpu.core_type = #tpu.core_type<tc>, window_params = [{transform_indices = @transform_0, window_bounds = array<i64: 256, 64>}, {transform_indices = @transform_1, window_bounds = array<i64: 256, 16>}, {pipeline_mode = #tpu.pipeline_mode<synchronous>, transform_indices = @transform_2, window_bounds = array<i64: 64, 32>}, {pipeline_mode = #tpu.pipeline_mode<synchronous>, transform_indices = @transform_3, window_bounds = array<i64: 1, 32>}, {pipeline_mode = #tpu.pipeline_mode<synchronous>, transform_indices = @transform_4, window_bounds = array<i64: 32, 32>}, {pipeline_mode = #tpu.pipeline_mode<synchronous>, transform_indices = @transform_5, window_bounds = array<i64: 1, 32>}, {pipeline_mode = #tpu.pipeline_mode<synchronous>, transform_indices = @transform_6, window_bounds = array<i64: 16, 32>}, {pipeline_mode = #tpu.pipeline_mode<synchronous>, transform_indices = @transform_7, window_bounds = array<i64: 1, 32>}, {pipeline_mode = #tpu.pipeline_mode<synchronous>, transform_indices = @transform_8, window_bounds = array<i64: 32, 64>}, {pipeline_mode = #tpu.pipeline_mode<synchronous>, transform_indices = @transform_9, window_bounds = array<i64: 1, 64>}, {transform_indices = @transform_10, window_bounds = array<i64: 256, 128>}]} {
    %c0 = arith.constant 0 : index
    %c0_0 = arith.constant 0 : index
    %0 = vector.load %arg1[%c0, %c0_0] : memref<256x64xbf16, #tpu.memory_space<vmem>>, vector<256x64xbf16>
    %c0_1 = arith.constant 0 : index
    %c0_2 = arith.constant 0 : index
    %1 = vector.load %arg3[%c0_1, %c0_2] : memref<64x32xbf16, #tpu.memory_space<vmem>>, vector<64x32xbf16>
    %cst = arith.constant dense<0.000000e+00> : vector<256x32xf32>
    %2 = tpu.matmul %0, %1, %cst {dimension_numbers = #tpu.dot_dimension_numbers<[1], [0], [0], [1], [0, 0, 1, 1], [], []>} : vector<256x64xbf16>, vector<64x32xbf16>, vector<256x32xf32> -> vector<256x32xf32>
    %c0_3 = arith.constant 0 : index
    %c0_4 = arith.constant 0 : index
    %3 = vector.load %arg4[%c0_3, %c0_4] : memref<1x32xf32, #tpu.memory_space<vmem>>, vector<1x32xf32>
    %4 = vector.broadcast %3 : vector<1x32xf32> to vector<256x32xf32>
    %5 = arith.addf %2, %4 : vector<256x32xf32>
    %cst_5 = arith.constant 0.000000e+00 : f32
    %6 = vector.broadcast %cst_5 : f32 to vector<256x32xf32>
    %7 = arith.maximumf %5, %6 : vector<256x32xf32>
    %8 = arith.truncf %7 : vector<256x32xf32> to vector<256x32xbf16>
    %c0_6 = arith.constant 0 : index
    %c0_7 = arith.constant 0 : index
    %9 = vector.load %arg5[%c0_6, %c0_7] : memref<32x32xbf16, #tpu.memory_space<vmem>>, vector<32x32xbf16>
    %cst_8 = arith.constant dense<0.000000e+00> : vector<256x32xf32>
    %10 = tpu.matmul %8, %9, %cst_8 {dimension_numbers = #tpu.dot_dimension_numbers<[1], [0], [0], [1], [0, 0, 1, 1], [], []>} : vector<256x32xbf16>, vector<32x32xbf16>, vector<256x32xf32> -> vector<256x32xf32>
    %c0_9 = arith.constant 0 : index
    %c0_10 = arith.constant 0 : index
    %11 = vector.load %arg6[%c0_9, %c0_10] : memref<1x32xf32, #tpu.memory_space<vmem>>, vector<1x32xf32>
    %12 = vector.broadcast %11 : vector<1x32xf32> to vector<256x32xf32>
    %13 = arith.addf %10, %12 : vector<256x32xf32>
    %14 = vector.extract_strided_slice %13 {offsets = [0, 0], sizes = [256, 16], strides = [1, 1]} : vector<256x32xf32> to vector<256x16xf32>
    %15 = vector.extract_strided_slice %13 {offsets = [0, 16], sizes = [256, 16], strides = [1, 1]} : vector<256x32xf32> to vector<256x16xf32>
    %16 = math.exp %15 : vector<256x16xf32>
    %cst_11 = arith.constant 5.000000e-01 : f32
    %17 = vector.broadcast %cst_11 : f32 to vector<256x16xf32>
    %18 = arith.mulf %17, %16 : vector<256x16xf32>
    %c0_12 = arith.constant 0 : index
    %c0_13 = arith.constant 0 : index
    %19 = vector.load %arg2[%c0_12, %c0_13] : memref<256x16xf32, #tpu.memory_space<vmem>>, vector<256x16xf32>
    %20 = arith.mulf %19, %18 : vector<256x16xf32>
    %21 = arith.addf %20, %14 : vector<256x16xf32>
    %22 = arith.truncf %21 : vector<256x16xf32> to vector<256x16xbf16>
    %c0_14 = arith.constant 0 : index
    %c0_15 = arith.constant 0 : index
    %23 = vector.load %arg7[%c0_14, %c0_15] : memref<16x32xbf16, #tpu.memory_space<vmem>>, vector<16x32xbf16>
    %cst_16 = arith.constant dense<0.000000e+00> : vector<256x32xf32>
    %24 = tpu.matmul %22, %23, %cst_16 {dimension_numbers = #tpu.dot_dimension_numbers<[1], [0], [0], [1], [0, 0, 1, 1], [], []>} : vector<256x16xbf16>, vector<16x32xbf16>, vector<256x32xf32> -> vector<256x32xf32>
    %c0_17 = arith.constant 0 : index
    %c0_18 = arith.constant 0 : index
    %25 = vector.load %arg8[%c0_17, %c0_18] : memref<1x32xf32, #tpu.memory_space<vmem>>, vector<1x32xf32>
    %26 = vector.broadcast %25 : vector<1x32xf32> to vector<256x32xf32>
    %27 = arith.addf %24, %26 : vector<256x32xf32>
    %cst_19 = arith.constant 0.000000e+00 : f32
    %28 = vector.broadcast %cst_19 : f32 to vector<256x32xf32>
    %29 = arith.maximumf %27, %28 : vector<256x32xf32>
    %30 = arith.truncf %29 : vector<256x32xf32> to vector<256x32xbf16>
    %c0_20 = arith.constant 0 : index
    %c0_21 = arith.constant 0 : index
    %31 = vector.load %arg9[%c0_20, %c0_21] : memref<32x64xbf16, #tpu.memory_space<vmem>>, vector<32x64xbf16>
    %cst_22 = arith.constant dense<0.000000e+00> : vector<256x64xf32>
    %32 = tpu.matmul %30, %31, %cst_22 {dimension_numbers = #tpu.dot_dimension_numbers<[1], [0], [0], [1], [0, 0, 1, 1], [], []>} : vector<256x32xbf16>, vector<32x64xbf16>, vector<256x64xf32> -> vector<256x64xf32>
    %c0_23 = arith.constant 0 : index
    %c0_24 = arith.constant 0 : index
    %33 = vector.load %arg10[%c0_23, %c0_24] : memref<1x64xf32, #tpu.memory_space<vmem>>, vector<1x64xf32>
    %34 = vector.broadcast %33 : vector<1x64xf32> to vector<256x64xf32>
    %35 = arith.addf %32, %34 : vector<256x64xf32>
    %36 = arith.negf %35 : vector<256x64xf32>
    %37 = math.exp %36 : vector<256x64xf32>
    %cst_25 = arith.constant 1.000000e+00 : f32
    %38 = vector.broadcast %cst_25 : f32 to vector<256x64xf32>
    %39 = arith.addf %38, %37 : vector<256x64xf32>
    %40 = arith.divf %38, %39 : vector<256x64xf32>
    %cst_26 = arith.constant 0.000000e+00 : f32
    %41 = vector.broadcast %cst_26 : f32 to vector<256x32xf32>
    %42 = tpu.concatenate %40, %13, %41 in 1 : vector<256x64xf32>, vector<256x32xf32>, vector<256x32xf32> -> vector<256x128xf32>
    %c0_27 = arith.constant 0 : index
    %c0_28 = arith.constant 0 : index
    %43 = vector.load %arg11[%c0_27, %c0_28] : memref<256x128xf32, #tpu.memory_space<vmem>>, vector<256x128xf32>
    tpu.vector_store %arg11[%c0_27, %c0_28], %42 {strides = array<i32>} : memref<256x128xf32, #tpu.memory_space<vmem>>, vector<256x128xf32>,
    return
  }
  func.func @transform_0(%arg0: i32) -> (i32, i32) {
    %c0_i32 = arith.constant 0 : i32
    %c0_i32_0 = arith.constant 0 : i32
    return %arg0, %c0_i32 : i32, i32
  }
  func.func @transform_1(%arg0: i32) -> (i32, i32) {
    %c0_i32 = arith.constant 0 : i32
    %c0_i32_0 = arith.constant 0 : i32
    return %arg0, %c0_i32 : i32, i32
  }
  func.func @transform_2(%arg0: i32) -> (i32, i32) {
    %c0_i32 = arith.constant 0 : i32
    %c0_i32_0 = arith.constant 0 : i32
    %c0_i32_1 = arith.constant 0 : i32
    return %c0_i32, %c0_i32_0 : i32, i32
  }
  func.func @transform_3(%arg0: i32) -> (i32, i32) {
    %c0_i32 = arith.constant 0 : i32
    %c0_i32_0 = arith.constant 0 : i32
    %c0_i32_1 = arith.constant 0 : i32
    return %c0_i32, %c0_i32_0 : i32, i32
  }
  func.func @transform_4(%arg0: i32) -> (i32, i32) {
    %c0_i32 = arith.constant 0 : i32
    %c0_i32_0 = arith.constant 0 : i32
    %c0_i32_1 = arith.constant 0 : i32
    return %c0_i32, %c0_i32_0 : i32, i32
  }
  func.func @transform_5(%arg0: i32) -> (i32, i32) {
    %c0_i32 = arith.constant 0 : i32
    %c0_i32_0 = arith.constant 0 : i32
    %c0_i32_1 = arith.constant 0 : i32
    return %c0_i32, %c0_i32_0 : i32, i32
  }
  func.func @transform_6(%arg0: i32) -> (i32, i32) {
    %c0_i32 = arith.constant 0 : i32
    %c0_i32_0 = arith.constant 0 : i32
    %c0_i32_1 = arith.constant 0 : i32
    return %c0_i32, %c0_i32_0 : i32, i32
  }
  func.func @transform_7(%arg0: i32) -> (i32, i32) {
    %c0_i32 = arith.constant 0 : i32
    %c0_i32_0 = arith.constant 0 : i32
    %c0_i32_1 = arith.constant 0 : i32
    return %c0_i32, %c0_i32_0 : i32, i32
  }
  func.func @transform_8(%arg0: i32) -> (i32, i32) {
    %c0_i32 = arith.constant 0 : i32
    %c0_i32_0 = arith.constant 0 : i32
    %c0_i32_1 = arith.constant 0 : i32
    return %c0_i32, %c0_i32_0 : i32, i32
  }
  func.func @transform_9(%arg0: i32) -> (i32, i32) {
    %c0_i32 = arith.constant 0 : i32
    %c0_i32_0 = arith.constant 0 : i32
    %c0_i32_1 = arith.constant 0 : i32
    return %c0_i32, %c0_i32_0 : i32, i32
  }
  func.func @transform_10(%arg0: i32) -> (i32, i32) {
    %c0_i32 = arith.constant 0 : i32
    %c0_i32_0 = arith.constant 0 : i32
    return %arg0, %c0_i32 : i32, i32
  }
}

</mosaic_0001>

<llo_original>
// kernel: tpu_custom_call.1
$region0: #{tpu_custom_call.1}
  #allocation0 [shape = 'u32[]', space=smem, size = 0x4, offset = 0x4, fixed_abs, tag = 'smem constant byte address 0x4 - core index']
  #allocation1 [shape = 'u32[144,128]{1,0:T(1,128)}', space=vmem, size = 0x12000, scoped, tag = 'internal scratch']
  %s0 = inlined_call_operand.vmem [shape: bf16[256,64], index: 0, kind: input, shape index: {}]
  %s1 = inlined_call_operand.vmem [shape: f32[256,16], index: 1, kind: input, shape index: {}]
  %s2 = inlined_call_operand.vmem [shape: bf16[64,32], index: 2, kind: input, shape index: {}]
  %s3 = inlined_call_operand.vmem [shape: f32[1,32], index: 3, kind: input, shape index: {}]
  %s4 = inlined_call_operand.vmem [shape: bf16[32,32], index: 4, kind: input, shape index: {}]
  %s5 = inlined_call_operand.vmem [shape: f32[1,32], index: 5, kind: input, shape index: {}]
  %s6 = inlined_call_operand.vmem [shape: bf16[16,32], index: 6, kind: input, shape index: {}]
  %s7 = inlined_call_operand.vmem [shape: f32[1,32], index: 7, kind: input, shape index: {}]
  %s8 = inlined_call_operand.vmem [shape: bf16[32,64], index: 8, kind: input, shape index: {}]
  %s9 = inlined_call_operand.vmem [shape: f32[1,64], index: 9, kind: input, shape index: {}]
  %s10 = inlined_call_operand.hbm [shape: f32[256,128], index: 10, kind: output, shape index: {}]
  %s11 = sld [smem:[#allocation0]]
  $region50: #{tpu_custom_call.1} parent=0
    _
  %s13 = ssub.s32 1, %s11
  %s14 = scalar_select 0, %s13, %s11
  $region1: #{tpu_custom_call.1} parent=0
    #allocation2 [shape = 'u8[131072]{0}', space=vmem, size = 0x20000, scoped, tag = 'output window, operand 0, single buffered']
    #allocation3 [shape = 's32[1]{0}', space=sflag, size = 0x4, scoped, tag = 'scoped memory for tpu_custom_call.1']
    %15 = vsyncpa [#allocation3], 0
    // Predicated region
    $region2: #{tpu_custom_call.1} parent=1 // pred_check
      _
    $region3: #{tpu_custom_call.1} parent=1 // pred_check_branch
      %17 = sbr.rel (0) target = $region5
    $region4: #{tpu_custom_call.1} parent=1 // pred_region
      _
    $region5: #{tpu_custom_call.1} parent=1 // pred_fallthru
      _
    // Predicated region
    $region6: #{tpu_custom_call.1} parent=1 // pred_check
      _
    $region7: #{tpu_custom_call.1} parent=1 // pred_check_branch
      %19 = sbr.rel (0) target = $region9
    $region8: #{tpu_custom_call.1} parent=1 // pred_region
      _
    $region9: #{tpu_custom_call.1} parent=1 // pred_fallthru
      _
    // Predicated region
    $region10: #{tpu_custom_call.1} parent=1 // pred_check
      _
    $region11: #{tpu_custom_call.1} parent=1 // pred_check_branch
      %21 = sbr.rel (0) target = $region13
    $region12: #{tpu_custom_call.1} parent=1 // pred_region
      _
    $region13: #{tpu_custom_call.1} parent=1 // pred_fallthru
      _
    // Predicated region
    $region14: #{tpu_custom_call.1} parent=1 // pred_check
      _
    $region15: #{tpu_custom_call.1} parent=1 // pred_check_branch
      %23 = sbr.rel (0) target = $region17
    $region16: #{tpu_custom_call.1} parent=1 // pred_region
      _
    $region17: #{tpu_custom_call.1} parent=1 // pred_fallthru
      _
    // Predicated region
    $region18: #{tpu_custom_call.1} parent=1 // pred_check
      _
    $region19: #{tpu_custom_call.1} parent=1 // pred_check_branch
      %25 = sbr.rel (0) target = $region21
    $region20: #{tpu_custom_call.1} parent=1 // pred_region
      _
    $region21: #{tpu_custom_call.1} parent=1 // pred_fallthru
      _
    // Predicated region
    $region22: #{tpu_custom_call.1} parent=1 // pred_check
      _
    $region23: #{tpu_custom_call.1} parent=1 // pred_check_branch
      %27 = sbr.rel (0) target = $region25
    $region24: #{tpu_custom_call.1} parent=1 // pred_region
      _
    $region25: #{tpu_custom_call.1} parent=1 // pred_fallthru
      _
    // Predicated region
    $region26: #{tpu_custom_call.1} parent=1 // pred_check
      _
    $region27: #{tpu_custom_call.1} parent=1 // pred_check_branch
      %29 = sbr.rel (0) target = $region29
    $region28: #{tpu_custom_call.1} parent=1 // pred_region
      _
    $region29: #{tpu_custom_call.1} parent=1 // pred_fallthru
      _
    // Predicated region
    $region30: #{tpu_custom_call.1} parent=1 // pred_check
      _
    $region31: #{tpu_custom_call.1} parent=1 // pred_check_branch
      %31 = sbr.rel (0) target = $region33
    $region32: #{tpu_custom_call.1} parent=1 // pred_region
      _
    $region33: #{tpu_custom_call.1} parent=1 // pred_fallthru
      _
    // Predicated region
    $region34: #{tpu_custom_call.1} parent=1 // pred_check
      _
    $region35: #{tpu_custom_call.1} parent=1 // pred_check_branch
      %33 = sbr.rel (0) target = $region37
    $region36: #{tpu_custom_call.1} parent=1 // pred_region
      _
    $region37: #{tpu_custom_call.1} parent=1 // pred_fallthru
      _
    // Predicated region
    $region38: #{tpu_custom_call.1} parent=1 // pred_check
      _
    $region39: #{tpu_custom_call.1} parent=1 // pred_check_branch
      %35 = sbr.rel (0) target = $region41
    $region40: #{tpu_custom_call.1} parent=1 // pred_region
      _
    $region41: #{tpu_custom_call.1} parent=1 // pred_fallthru
      _
    %v37 = vld [vmem:[%s0] sm:$0xf]
    %v38 = vld [vmem:[%s0 + $0x4] sm:$0xf]
    %v39 = vld [vmem:[%s0 + $0x8] sm:$0xf]
    %v40 = vld [vmem:[%s0 + $0xc] sm:$0xf]
    %v41 = vld [vmem:[%s0 + $0x10] sm:$0xf]
    %v42 = vld [vmem:[%s0 + $0x14] sm:$0xf]
    %v43 = vld [vmem:[%s0 + $0x18] sm:$0xf]
    %v44 = vld [vmem:[%s0 + $0x1c] sm:$0xf]
    %v45 = vld [vmem:[%s0 + $0x20] sm:$0xf]
    %v46 = vld [vmem:[%s0 + $0x24] sm:$0xf]
    %v47 = vld [vmem:[%s0 + $0x28] sm:$0xf]
    %v48 = vld [vmem:[%s0 + $0x2c] sm:$0xf]
    %v49 = vld [vmem:[%s0 + $0x30] sm:$0xf]
    %v50 = vld [vmem:[%s0 + $0x34] sm:$0xf]
    %v51 = vld [vmem:[%s0 + $0x38] sm:$0xf]
    %v52 = vld [vmem:[%s0 + $0x3c] sm:$0xf]
    %v53 = vld [vmem:[%s0 + $0x40] sm:$0xf]
    %v54 = vld [vmem:[%s0 + $0x44] sm:$0xf]
    %v55 = vld [vmem:[%s0 + $0x48] sm:$0xf]
    %v56 = vld [vmem:[%s0 + $0x4c] sm:$0xf]
    %v57 = vld [vmem:[%s0 + $0x50] sm:$0xf]
    %v58 = vld [vmem:[%s0 + $0x54] sm:$0xf]
    %v59 = vld [vmem:[%s0 + $0x58] sm:$0xf]
    %v60 = vld [vmem:[%s0 + $0x5c] sm:$0xf]
    %v61 = vld [vmem:[%s0 + $0x60] sm:$0xf]
    %v62 = vld [vmem:[%s0 + $0x64] sm:$0xf]
    %v63 = vld [vmem:[%s0 + $0x68] sm:$0xf]
    %v64 = vld [vmem:[%s0 + $0x6c] sm:$0xf]
    %v65 = vld [vmem:[%s0 + $0x70] sm:$0xf]
    %v66 = vld [vmem:[%s0 + $0x74] sm:$0xf]
    %v67 = vld [vmem:[%s0 + $0x78] sm:$0xf]
    %v68 = vld [vmem:[%s0 + $0x7c] sm:$0xf]
    %v69 = vld [vmem:[%s2] sm:$0xf]
    %v70 = vld [vmem:[%s2 + $0x4] sm:$0xf]
    %v71 = vld [vmem:[%s2 + $0x8] sm:$0xf]
    %v72 = vld [vmem:[%s2 + $0xc] sm:$0xf]
    %v73 = vld [vmem:[%s2 + $0x10] sm:$0xf]
    %v74 = vld [vmem:[%s2 + $0x14] sm:$0xf]
    %v75 = vld [vmem:[%s2 + $0x18] sm:$0xf]
    %v76 = vld [vmem:[%s2 + $0x1c] sm:$0xf]
    %v77 = vld [vmem:[%s3] sm:$0x1]
    %v79 = vlaneseq
    %v80 = vshrl.u32 %v79, 7
    %v81 = vsub.s32 0, %v80
    %v82 = vrot.slane %v77, %v81
    %v116 = vunpack.c.l.b16 %v37
    %v117 = vunpack.c.l.b16 %v38
    %v118 = vunpack.c.l.b16 %v39
    %v119 = vunpack.c.l.b16 %v40
    %v120 = vunpack.c.l.b16 %v41
    %v121 = vunpack.c.l.b16 %v42
    %v122 = vunpack.c.l.b16 %v43
    %v123 = vunpack.c.l.b16 %v44
    %v124 = vunpack.c.l.b16 %v45
    %v125 = vunpack.c.l.b16 %v46
    %v126 = vunpack.c.l.b16 %v47
    %v127 = vunpack.c.l.b16 %v48
    %v128 = vunpack.c.l.b16 %v49
    %v129 = vunpack.c.l.b16 %v50
    %v130 = vunpack.c.l.b16 %v51
    %v131 = vunpack.c.l.b16 %v52
    %v132 = vunpack.c.l.b16 %v53
    %v133 = vunpack.c.l.b16 %v54
    %v134 = vunpack.c.l.b16 %v55
    %v135 = vunpack.c.l.b16 %v56
    %v136 = vunpack.c.l.b16 %v57
    %v137 = vunpack.c.l.b16 %v58
    %v138 = vunpack.c.l.b16 %v59
    %v139 = vunpack.c.l.b16 %v60
    %v140 = vunpack.c.l.b16 %v61
    %v141 = vunpack.c.l.b16 %v62
    %v142 = vunpack.c.l.b16 %v63
    %v143 = vunpack.c.l.b16 %v64
    %v144 = vunpack.c.l.b16 %v65
    %v145 = vunpack.c.l.b16 %v66
    %v146 = vunpack.c.l.b16 %v67
    %v147 = vunpack.c.l.b16 %v68
    %v148 = vpack.c.b16 %v117, %v116
    %v149 = vpack.c.b16 %v119, %v118
    %v150 = vpack.c.b16 %v121, %v120
    %v151 = vpack.c.b16 %v123, %v122
    %v152 = vpack.c.b16 %v125, %v124
    %v153 = vpack.c.b16 %v127, %v126
    %v154 = vpack.c.b16 %v129, %v128
    %v155 = vpack.c.b16 %v131, %v130
    %v156 = vpack.c.b16 %v133, %v132
    %v157 = vpack.c.b16 %v135, %v134
    %v158 = vpack.c.b16 %v137, %v136
    %v159 = vpack.c.b16 %v139, %v138
    %v160 = vpack.c.b16 %v141, %v140
    %v161 = vpack.c.b16 %v143, %v142
    %v162 = vpack.c.b16 %v145, %v144
    %v163 = vpack.c.b16 %v147, %v146
    %v172 = vunpack.c.l.b16 %v69
    %v173 = vunpack.c.l.b16 %v70
    %v174 = vunpack.c.l.b16 %v71
    %v175 = vunpack.c.l.b16 %v72
    %v176 = vunpack.c.l.b16 %v73
    %v177 = vunpack.c.l.b16 %v74
    %v178 = vunpack.c.l.b16 %v75
    %v179 = vunpack.c.l.b16 %v76
    %v180 = vpack.c.b16 %v173, %v172
    %v181 = vpack.c.b16 %v175, %v174
    %v182 = vpack.c.b16 %v177, %v176
    %v183 = vpack.c.b16 %v179, %v178
    %vm188 = vcmask 523264
    %v190 = vsel %vm188, %v148, 0
    %v193 = vsel %vm188, %v149, 0
    %v196 = vsel %vm188, %v150, 0
    %v199 = vsel %vm188, %v151, 0
    %v202 = vsel %vm188, %v152, 0
    %v205 = vsel %vm188, %v153, 0
    %v208 = vsel %vm188, %v154, 0
    %v211 = vsel %vm188, %v155, 0
    %v214 = vsel %vm188, %v156, 0
    %v217 = vsel %vm188, %v157, 0
    %v220 = vsel %vm188, %v158, 0
    %v223 = vsel %vm188, %v159, 0
    %v226 = vsel %vm188, %v160, 0
    %v229 = vsel %vm188, %v161, 0
    %v232 = vsel %vm188, %v162, 0
    %v235 = vsel %vm188, %v163, 0
    %237 = vmatprep.subr.bf16.mxu0 0
    %238 = vmatpush1.bf16.msra.mxu0 %v180
    %239 = vmatprep.subr.bf16.mxu0 0
    %240 = vmatpush1.bf16.msra.mxu0 %v181
    %241 = vmatprep.subr.bf16.mxu0 0
    %242 = vmatpush1.bf16.msra.mxu0 %v182
    %243 = vmatprep.subr.bf16.mxu0 0
    %244 = vmatpush1.bf16.msra.mxu0 %v183
    %245 = vmatprep.subr.bf16.mxu0 0
    %246 = vmatpush1.bf16.msra.mxu0 0
    %247 = vmatprep.subr.bf16.mxu0 0
    %248 = vmatpush1.bf16.msra.mxu0 0
    %249 = vmatprep.subr.bf16.mxu0 0
    %250 = vmatpush1.bf16.msra.mxu0 0
    %251 = vmatprep.subr.bf16.mxu0 0
    %252 = vmatpush1.bf16.msra.mxu0 0
    %253 = vmatprep.subr.bf16.mxu0 0
    %254 = vmatpush1.bf16.msra.mxu0 0
    %255 = vmatprep.subr.bf16.mxu0 0
    %256 = vmatpush1.bf16.msra.mxu0 0
    %257 = vmatprep.subr.bf16.mxu0 0
    %258 = vmatpush1.bf16.msra.mxu0 0
    %259 = vmatprep.subr.bf16.mxu0 0
    %260 = vmatpush1.bf16.msra.mxu0 0
    %261 = vmatprep.subr.bf16.mxu0 0
    %262 = vmatpush1.bf16.msra.mxu0 0
    %263 = vmatprep.subr.bf16.mxu0 0
    %264 = vmatpush1.bf16.msra.mxu0 0
    %265 = vmatprep.subr.bf16.mxu0 0
    %266 = vmatpush1.bf16.msra.mxu0 0
    %267 = vmatprep.subr.bf16.mxu0 0
    %268 = vmatpush1.bf16.msra.mxu0 0
    %269 = vmatprep.mubr.bf16.mxu0 0
    %270 = vmatmul.mubr.bf16.gmra.mrb[0].mxu0 %v190
    %v271 = vpop.f32.mrb[0].mxu0
    %v272 = vadd.f32 %v82, %v271
    %v273 = vpop.f32.mrb[0].mxu0
    %v274 = vpop.f32.mrb[0].mxu0
    %v275 = vadd.f32 %v82, %v274
    %v276 = vpop.f32.mrb[0].mxu0
    %277 = vmatprep.mubr.bf16.mxu0 0
    %278 = vmatmul.mubr.bf16.gmra.mrb[0].mxu0 %v193
    %v279 = vpop.f32.mrb[0].mxu0
    %v280 = vadd.f32 %v82, %v279
    %v281 = vpop.f32.mrb[0].mxu0
    %v282 = vpop.f32.mrb[0].mxu0
    %v283 = vadd.f32 %v82, %v282
    %v284 = vpop.f32.mrb[0].mxu0
    %285 = vmatprep.mubr.bf16.mxu0 0
    %286 = vmatmul.mubr.bf16.gmra.mrb[0].mxu0 %v196
    %v287 = vpop.f32.mrb[0].mxu0
    %v288 = vadd.f32 %v82, %v287
    %v289 = vpop.f32.mrb[0].mxu0
    %v290 = vpop.f32.mrb[0].mxu0
    %v291 = vadd.f32 %v82, %v290
    %v292 = vpop.f32.mrb[0].mxu0
    %293 = vmatprep.mubr.bf16.mxu0 0
    %294 = vmatmul.mubr.bf16.gmra.mrb[0].mxu0 %v199
    %v295 = vpop.f32.mrb[0].mxu0
    %v296 = vadd.f32 %v82, %v295
    %v297 = vpop.f32.mrb[0].mxu0
    %v298 = vpop.f32.mrb[0].mxu0
    %v299 = vadd.f32 %v82, %v298
    %v300 = vpop.f32.mrb[0].mxu0
    %301 = vmatprep.mubr.bf16.mxu0 0
    %302 = vmatmul.mubr.bf16.gmra.mrb[0].mxu0 %v202
    %v303 = vpop.f32.mrb[0].mxu0
    %v304 = vadd.f32 %v82, %v303
    %v305 = vpop.f32.mrb[0].mxu0
    %v306 = vpop.f32.mrb[0].mxu0
    %v307 = vadd.f32 %v82, %v306
    %v308 = vpop.f32.mrb[0].mxu0
    %309 = vmatprep.mubr.bf16.mxu0 0
    %310 = vmatmul.mubr.bf16.gmra.mrb[0].mxu0 %v205
    %v311 = vpop.f32.mrb[0].mxu0
    %v312 = vadd.f32 %v82, %v311
    %v313 = vpop.f32.mrb[0].mxu0
    %v314 = vpop.f32.mrb[0].mxu0
    %v315 = vadd.f32 %v82, %v314
    %v316 = vpop.f32.mrb[0].mxu0
    %317 = vmatprep.mubr.bf16.mxu0 0
    %318 = vmatmul.mubr.bf16.gmra.mrb[0].mxu0 %v208
    %v319 = vpop.f32.mrb[0].mxu0
    %v320 = vadd.f32 %v82, %v319
    %v321 = vpop.f32.mrb[0].mxu0
    %v322 = vpop.f32.mrb[0].mxu0
    %v323 = vadd.f32 %v82, %v322
    %v324 = vpop.f32.mrb[0].mxu0
    %325 = vmatprep.mubr.bf16.mxu0 0
    %326 = vmatmul.mubr.bf16.gmra.mrb[0].mxu0 %v211
    %v327 = vpop.f32.mrb[0].mxu0
    %v328 = vadd.f32 %v82, %v327
    %v329 = vpop.f32.mrb[0].mxu0
    %v330 = vpop.f32.mrb[0].mxu0
    %v331 = vadd.f32 %v82, %v330
    %v332 = vpop.f32.mrb[0].mxu0
    %333 = vmatprep.mubr.bf16.mxu0 0
    %334 = vmatmul.mubr.bf16.gmra.mrb[0].mxu0 %v214
    %v335 = vpop.f32.mrb[0].mxu0
    %v336 = vadd.f32 %v82, %v335
    %v337 = vpop.f32.mrb[0].mxu0
    %v338 = vpop.f32.mrb[0].mxu0
    %v339 = vadd.f32 %v82, %v338
    %v340 = vpop.f32.mrb[0].mxu0
    %341 = vmatprep.mubr.bf16.mxu0 0
    %342 = vmatmul.mubr.bf16.gmra.mrb[0].mxu0 %v217
    %v343 = vpop.f32.mrb[0].mxu0
    %v344 = vadd.f32 %v82, %v343
    %v345 = vpop.f32.mrb[0].mxu0
    %v346 = vpop.f32.mrb[0].mxu0
    %v347 = vadd.f32 %v82, %v346
    %v348 = vpop.f32.mrb[0].mxu0
    %349 = vmatprep.mubr.bf16.mxu0 0
    %350 = vmatmul.mubr.bf16.gmra.mrb[0].mxu0 %v220
    %v351 = vpop.f32.mrb[0].mxu0
    %v352 = vadd.f32 %v82, %v351
    %v353 = vpop.f32.mrb[0].mxu0
    %v354 = vpop.f32.mrb[0].mxu0
    %v355 = vadd.f32 %v82, %v354
    %v356 = vpop.f32.mrb[0].mxu0
    %357 = vmatprep.mubr.bf16.mxu0 0
    %358 = vmatmul.mubr.bf16.gmra.mrb[0].mxu0 %v223
    %v359 = vpop.f32.mrb[0].mxu0
    %v360 = vadd.f32 %v82, %v359
    %v361 = vpop.f32.mrb[0].mxu0
    %v362 = vpop.f32.mrb[0].mxu0
    %v363 = vadd.f32 %v82, %v362
    %v364 = vpop.f32.mrb[0].mxu0
    %365 = vmatprep.mubr.bf16.mxu0 0
    %366 = vmatmul.mubr.bf16.gmra.mrb[0].mxu0 %v226
    %v367 = vpop.f32.mrb[0].mxu0
    %v368 = vadd.f32 %v82, %v367
    %v369 = vpop.f32.mrb[0].mxu0
    %v370 = vpop.f32.mrb[0].mxu0
    %v371 = vadd.f32 %v82, %v370
    %v372 = vpop.f32.mrb[0].mxu0
    %373 = vmatprep.mubr.bf16.mxu0 0
    %374 = vmatmul.mubr.bf16.gmra.mrb[0].mxu0 %v229
    %v375 = vpop.f32.mrb[0].mxu0
    %v376 = vadd.f32 %v82, %v375
    %v377 = vpop.f32.mrb[0].mxu0
    %v378 = vpop.f32.mrb[0].mxu0
    %v379 = vadd.f32 %v82, %v378
    %v380 = vpop.f32.mrb[0].mxu0
    %381 = vmatprep.mubr.bf16.mxu0 0
    %382 = vmatmul.mubr.bf16.gmra.mrb[0].mxu0 %v232
    %v383 = vpop.f32.mrb[0].mxu0
    %v384 = vadd.f32 %v82, %v383
    %v385 = vpop.f32.mrb[0].mxu0
    %v386 = vpop.f32.mrb[0].mxu0
    %v387 = vadd.f32 %v82, %v386
    %v388 = vpop.f32.mrb[0].mxu0
    %389 = vmatprep.mubr.bf16.mxu0 0
    %390 = vmatmul.mubr.bf16.gmra.mrb[0].mxu0 %v235
    %v391 = vpop.f32.mrb[0].mxu0
    %v392 = vadd.f32 %v82, %v391
    %v393 = vpop.f32.mrb[0].mxu0
    %v394 = vpop.f32.mrb[0].mxu0
    %v395 = vadd.f32 %v82, %v394
    %v396 = vpop.f32.mrb[0].mxu0
    %397 = vdwg.mxu0
    %v398 = vmax.f32 %v272, 0.0
    %v399 = vmax.f32 %v275, 0.0
    %v400 = vmax.f32 %v280, 0.0
    %v401 = vmax.f32 %v283, 0.0
    %v402 = vmax.f32 %v288, 0.0
    %v403 = vmax.f32 %v291, 0.0
    %v404 = vmax.f32 %v296, 0.0
    %v405 = vmax.f32 %v299, 0.0
    %v406 = vmax.f32 %v304, 0.0
    %v407 = vmax.f32 %v307, 0.0
    %v408 = vmax.f32 %v312, 0.0
    %v409 = vmax.f32 %v315, 0.0
    %v410 = vmax.f32 %v320, 0.0
    %v411 = vmax.f32 %v323, 0.0
    %v412 = vmax.f32 %v328, 0.0
    %v413 = vmax.f32 %v331, 0.0
    %v414 = vmax.f32 %v336, 0.0
    %v415 = vmax.f32 %v339, 0.0
    %v416 = vmax.f32 %v344, 0.0
    %v417 = vmax.f32 %v347, 0.0
    %v418 = vmax.f32 %v352, 0.0
    %v419 = vmax.f32 %v355, 0.0
    %v420 = vmax.f32 %v360, 0.0
    %v421 = vmax.f32 %v363, 0.0
    %v422 = vmax.f32 %v368, 0.0
    %v423 = vmax.f32 %v371, 0.0
    %v424 = vmax.f32 %v376, 0.0
    %v425 = vmax.f32 %v379, 0.0
    %v426 = vmax.f32 %v384, 0.0
    %v427 = vmax.f32 %v387, 0.0
    %v428 = vmax.f32 %v392, 0.0
    %v429 = vmax.f32 %v395, 0.0
    %v430 = vpack.c.bf16 %v399, %v398
    %v431 = vpack.c.bf16 %v401, %v400
    %v432 = vpack.c.bf16 %v403, %v402
    %v433 = vpack.c.bf16 %v405, %v404
    %v434 = vpack.c.bf16 %v407, %v406
    %v435 = vpack.c.bf16 %v409, %v408
    %v436 = vpack.c.bf16 %v411, %v410
    %v437 = vpack.c.bf16 %v413, %v412
    %v438 = vpack.c.bf16 %v415, %v414
    %v439 = vpack.c.bf16 %v417, %v416
    %v440 = vpack.c.bf16 %v419, %v418
    %v441 = vpack.c.bf16 %v421, %v420
    %v442 = vpack.c.bf16 %v423, %v422
    %v443 = vpack.c.bf16 %v425, %v424
    %v444 = vpack.c.bf16 %v427, %v426
    %v445 = vpack.c.bf16 %v429, %v428
    %v446 = vld [vmem:[%s4] sm:$0xf]
    %v447 = vld [vmem:[%s4 + $0x4] sm:$0xf]
    %v448 = vld [vmem:[%s4 + $0x8] sm:$0xf]
    %v449 = vld [vmem:[%s4 + $0xc] sm:$0xf]
    %v450 = vld [vmem:[%s5] sm:$0x1]
    %v452 = vlaneseq
    %v453 = vshrl.u32 %v452, 7
    %v454 = vsub.s32 0, %v453
    %v455 = vrot.slane %v450, %v454
    %v461 = vunpack.c.l.b16 %v446
    %v462 = vunpack.c.l.b16 %v447
    %v463 = vunpack.c.l.b16 %v448
    %v464 = vunpack.c.l.b16 %v449
    %v465 = vpack.c.b16 %v462, %v461
    %v466 = vpack.c.b16 %v464, %v463
    %vm469 = vcmask 261120
    %v471 = vsel %vm469, %v430, 0
    %v474 = vsel %vm469, %v431, 0
    %v477 = vsel %vm469, %v432, 0
    %v480 = vsel %vm469, %v433, 0
    %v483 = vsel %vm469, %v434, 0
    %v486 = vsel %vm469, %v435, 0
    %v489 = vsel %vm469, %v436, 0
    %v492 = vsel %vm469, %v437, 0
    %v495 = vsel %vm469, %v438, 0
    %v498 = vsel %vm469, %v439, 0
    %v501 = vsel %vm469, %v440, 0
    %v504 = vsel %vm469, %v441, 0
    %v507 = vsel %vm469, %v442, 0
    %v510 = vsel %vm469, %v443, 0
    %v513 = vsel %vm469, %v444, 0
    %v516 = vsel %vm469, %v445, 0
    %518 = vmatprep.subr.bf16.mxu0 0
    %519 = vmatpush1.bf16.msra.mxu0 %v465
    %520 = vmatprep.subr.bf16.mxu0 0
    %521 = vmatpush1.bf16.msra.mxu0 %v466
    %522 = vmatprep.subr.bf16.mxu0 0
    %523 = vmatpush1.bf16.msra.mxu0 0
    %524 = vmatprep.subr.bf16.mxu0 0
    %525 = vmatpush1.bf16.msra.mxu0 0
    %526 = vmatprep.subr.bf16.mxu0 0
    %527 = vmatpush1.bf16.msra.mxu0 0
    %528 = vmatprep.subr.bf16.mxu0 0
    %529 = vmatpush1.bf16.msra.mxu0 0
    %530 = vmatprep.subr.bf16.mxu0 0
    %531 = vmatpush1.bf16.msra.mxu0 0
    %532 = vmatprep.subr.bf16.mxu0 0
    %533 = vmatpush1.bf16.msra.mxu0 0
    %534 = vmatprep.subr.bf16.mxu0 0
    %535 = vmatpush1.bf16.msra.mxu0 0
    %536 = vmatprep.subr.bf16.mxu0 0
    %537 = vmatpush1.bf16.msra.mxu0 0
    %538 = vmatprep.subr.bf16.mxu0 0
    %539 = vmatpush1.bf16.msra.mxu0 0
    %540 = vmatprep.subr.bf16.mxu0 0
    %541 = vmatpush1.bf16.msra.mxu0 0
    %542 = vmatprep.subr.bf16.mxu0 0
    %543 = vmatpush1.bf16.msra.mxu0 0
    %544 = vmatprep.subr.bf16.mxu0 0
    %545 = vmatpush1.bf16.msra.mxu0 0
    %546 = vmatprep.subr.bf16.mxu0 0
    %547 = vmatpush1.bf16.msra.mxu0 0
    %548 = vmatprep.subr.bf16.mxu0 0
    %549 = vmatpush1.bf16.msra.mxu0 0
    %550 = vmatprep.mubr.bf16.mxu0 0
    %551 = vmatmul.mubr.bf16.gmra.mrb[0].mxu0 %v471
    %v552 = vpop.f32.mrb[0].mxu0
    %v553 = vadd.f32 %v455, %v552
    %v554 = vpop.f32.mrb[0].mxu0
    %v555 = vpop.f32.mrb[0].mxu0
    %v556 = vadd.f32 %v455, %v555
    %v557 = vpop.f32.mrb[0].mxu0
    %558 = vmatprep.mubr.bf16.mxu0 0
    %559 = vmatmul.mubr.bf16.gmra.mrb[0].mxu0 %v474
    %v560 = vpop.f32.mrb[0].mxu0
    %v561 = vadd.f32 %v455, %v560
    %v562 = vpop.f32.mrb[0].mxu0
    %v563 = vpop.f32.mrb[0].mxu0
    %v564 = vadd.f32 %v455, %v563
    %v565 = vpop.f32.mrb[0].mxu0
    %566 = vmatprep.mubr.bf16.mxu0 0
    %567 = vmatmul.mubr.bf16.gmra.mrb[0].mxu0 %v477
    %v568 = vpop.f32.mrb[0].mxu0
    %v569 = vadd.f32 %v455, %v568
    %v570 = vpop.f32.mrb[0].mxu0
    %v571 = vpop.f32.mrb[0].mxu0
    %v572 = vadd.f32 %v455, %v571
    %v573 = vpop.f32.mrb[0].mxu0
    %574 = vmatprep.mubr.bf16.mxu0 0
    %575 = vmatmul.mubr.bf16.gmra.mrb[0].mxu0 %v480
    %v576 = vpop.f32.mrb[0].mxu0
    %v577 = vadd.f32 %v455, %v576
    %v578 = vpop.f32.mrb[0].mxu0
    %v579 = vpop.f32.mrb[0].mxu0
    %v580 = vadd.f32 %v455, %v579
    %v581 = vpop.f32.mrb[0].mxu0
    %582 = vmatprep.mubr.bf16.mxu0 0
    %583 = vmatmul.mubr.bf16.gmra.mrb[0].mxu0 %v483
    %v584 = vpop.f32.mrb[0].mxu0
    %v585 = vadd.f32 %v455, %v584
    %v586 = vpop.f32.mrb[0].mxu0
    %v587 = vpop.f32.mrb[0].mxu0
    %v588 = vadd.f32 %v455, %v587
    %v589 = vpop.f32.mrb[0].mxu0
    %590 = vmatprep.mubr.bf16.mxu0 0
    %591 = vmatmul.mubr.bf16.gmra.mrb[0].mxu0 %v486
    %v592 = vpop.f32.mrb[0].mxu0
    %v593 = vadd.f32 %v455, %v592
    %v594 = vpop.f32.mrb[0].mxu0
    %v595 = vpop.f32.mrb[0].mxu0
    %v596 = vadd.f32 %v455, %v595
    %v597 = vpop.f32.mrb[0].mxu0
    %598 = vmatprep.mubr.bf16.mxu0 0
    %599 = vmatmul.mubr.bf16.gmra.mrb[0].mxu0 %v489
    %v600 = vpop.f32.mrb[0].mxu0
    %v601 = vadd.f32 %v455, %v600
    %v602 = vpop.f32.mrb[0].mxu0
    %v603 = vpop.f32.mrb[0].mxu0
    %v604 = vadd.f32 %v455, %v603
    %v605 = vpop.f32.mrb[0].mxu0
    %606 = vmatprep.mubr.bf16.mxu0 0
    %607 = vmatmul.mubr.bf16.gmra.mrb[0].mxu0 %v492
    %v608 = vpop.f32.mrb[0].mxu0
    %v609 = vadd.f32 %v455, %v608
    %v610 = vpop.f32.mrb[0].mxu0
    %v611 = vpop.f32.mrb[0].mxu0
    %v612 = vadd.f32 %v455, %v611
    %v613 = vpop.f32.mrb[0].mxu0
    %614 = vmatprep.mubr.bf16.mxu0 0
    %615 = vmatmul.mubr.bf16.gmra.mrb[0].mxu0 %v495
    %v616 = vpop.f32.mrb[0].mxu0
    %v617 = vadd.f32 %v455, %v616
    %v618 = vpop.f32.mrb[0].mxu0
    %v619 = vpop.f32.mrb[0].mxu0
    %v620 = vadd.f32 %v455, %v619
    %v621 = vpop.f32.mrb[0].mxu0
    %622 = vmatprep.mubr.bf16.mxu0 0
    %623 = vmatmul.mubr.bf16.gmra.mrb[0].mxu0 %v498
    %v624 = vpop.f32.mrb[0].mxu0
    %v625 = vadd.f32 %v455, %v624
    %v626 = vpop.f32.mrb[0].mxu0
    %v627 = vpop.f32.mrb[0].mxu0
    %v628 = vadd.f32 %v455, %v627
    %v629 = vpop.f32.mrb[0].mxu0
    %630 = vmatprep.mubr.bf16.mxu0 0
    %631 = vmatmul.mubr.bf16.gmra.mrb[0].mxu0 %v501
    %v632 = vpop.f32.mrb[0].mxu0
    %v633 = vadd.f32 %v455, %v632
    %v634 = vpop.f32.mrb[0].mxu0
    %v635 = vpop.f32.mrb[0].mxu0
    %v636 = vadd.f32 %v455, %v635
    %v637 = vpop.f32.mrb[0].mxu0
    %638 = vmatprep.mubr.bf16.mxu0 0
    %639 = vmatmul.mubr.bf16.gmra.mrb[0].mxu0 %v504
    %v640 = vpop.f32.mrb[0].mxu0
    %v641 = vadd.f32 %v455, %v640
    %v642 = vpop.f32.mrb[0].mxu0
    %v643 = vpop.f32.mrb[0].mxu0
    %v644 = vadd.f32 %v455, %v643
    %v645 = vpop.f32.mrb[0].mxu0
    %646 = vmatprep.mubr.bf16.mxu0 0
    %647 = vmatmul.mubr.bf16.gmra.mrb[0].mxu0 %v507
    %v648 = vpop.f32.mrb[0].mxu0
    %v649 = vadd.f32 %v455, %v648
    %v650 = vpop.f32.mrb[0].mxu0
    %v651 = vpop.f32.mrb[0].mxu0
    %v652 = vadd.f32 %v455, %v651
    %v653 = vpop.f32.mrb[0].mxu0
    %654 = vmatprep.mubr.bf16.mxu0 0
    %655 = vmatmul.mubr.bf16.gmra.mrb[0].mxu0 %v510
    %v656 = vpop.f32.mrb[0].mxu0
    %v657 = vadd.f32 %v455, %v656
    %v658 = vpop.f32.mrb[0].mxu0
    %v659 = vpop.f32.mrb[0].mxu0
    %v660 = vadd.f32 %v455, %v659
    %v661 = vpop.f32.mrb[0].mxu0
    %662 = vmatprep.mubr.bf16.mxu0 0
    %663 = vmatmul.mubr.bf16.gmra.mrb[0].mxu0 %v513
    %v664 = vpop.f32.mrb[0].mxu0
    %v665 = vadd.f32 %v455, %v664
    %v666 = vpop.f32.mrb[0].mxu0
    %v667 = vpop.f32.mrb[0].mxu0
    %v668 = vadd.f32 %v455, %v667
    %v669 = vpop.f32.mrb[0].mxu0
    %670 = vmatprep.mubr.bf16.mxu0 0
    %671 = vmatmul.mubr.bf16.gmra.mrb[0].mxu0 %v516
    %v672 = vpop.f32.mrb[0].mxu0
    %v673 = vadd.f32 %v455, %v672
    %v674 = vpop.f32.mrb[0].mxu0
    %v675 = vpop.f32.mrb[0].mxu0
    %v676 = vadd.f32 %v455, %v675
    %v677 = vpop.f32.mrb[0].mxu0
    %678 = vdwg.mxu0
    %v679 = vmul.f32 %v553, 1.442695
    %v680 = vpow.pop %v679
    %v681 = vmul.f32 %v556, 1.442695
    %v682 = vpow.pop %v681
    %v683 = vmul.f32 %v561, 1.442695
    %v684 = vpow.pop %v683
    %v685 = vmul.f32 %v564, 1.442695
    %v686 = vpow.pop %v685
    %v687 = vmul.f32 %v569, 1.442695
    %v688 = vpow.pop %v687
    %v689 = vmul.f32 %v572, 1.442695
    %v690 = vpow.pop %v689
    %v691 = vmul.f32 %v577, 1.442695
    %v692 = vpow.pop %v691
    %v693 = vmul.f32 %v580, 1.442695
    %v694 = vpow.pop %v693
    %v695 = vmul.f32 %v585, 1.442695
    %v696 = vpow.pop %v695
    %v697 = vmul.f32 %v588, 1.442695
    %v698 = vpow.pop %v697
    %v699 = vmul.f32 %v593, 1.442695
    %v700 = vpow.pop %v699
    %v701 = vmul.f32 %v596, 1.442695
    %v702 = vpow.pop %v701
    %v703 = vmul.f32 %v601, 1.442695
    %v704 = vpow.pop %v703
    %v705 = vmul.f32 %v604, 1.442695
    %v706 = vpow.pop %v705
    %v707 = vmul.f32 %v609, 1.442695
    %v708 = vpow.pop %v707
    %v709 = vmul.f32 %v612, 1.442695
    %v710 = vpow.pop %v709
    %v711 = vmul.f32 %v617, 1.442695
    %v712 = vpow.pop %v711
    %v713 = vmul.f32 %v620, 1.442695
    %v714 = vpow.pop %v713
    %v715 = vmul.f32 %v625, 1.442695
    %v716 = vpow.pop %v715
    %v717 = vmul.f32 %v628, 1.442695
    %v718 = vpow.pop %v717
    %v719 = vmul.f32 %v633, 1.442695
    %v720 = vpow.pop %v719
    %v721 = vmul.f32 %v636, 1.442695
    %v722 = vpow.pop %v721
    %v723 = vmul.f32 %v641, 1.442695
    %v724 = vpow.pop %v723
    %v725 = vmul.f32 %v644, 1.442695
    %v726 = vpow.pop %v725
    %v727 = vmul.f32 %v649, 1.442695
    %v728 = vpow.pop %v727
    %v729 = vmul.f32 %v652, 1.442695
    %v730 = vpow.pop %v729
    %v731 = vmul.f32 %v657, 1.442695
    %v732 = vpow.pop %v731
    %v733 = vmul.f32 %v660, 1.442695
    %v734 = vpow.pop %v733
    %v735 = vmul.f32 %v665, 1.442695
    %v736 = vpow.pop %v735
    %v737 = vmul.f32 %v668, 1.442695
    %v738 = vpow.pop %v737
    %v739 = vmul.f32 %v673, 1.442695
    %v740 = vpow.pop %v739
    %v741 = vmul.f32 %v676, 1.442695
    %v742 = vpow.pop %v741
    %v743 = vmul.f32 %v680, 0.5
    %v744 = vmul.f32 %v682, 0.5
    %v745 = vmul.f32 %v684, 0.5
    %v746 = vmul.f32 %v686, 0.5
    %v747 = vmul.f32 %v688, 0.5
    %v748 = vmul.f32 %v690, 0.5
    %v749 = vmul.f32 %v692, 0.5
    %v750 = vmul.f32 %v694, 0.5
    %v751 = vmul.f32 %v696, 0.5
    %v752 = vmul.f32 %v698, 0.5
    %v753 = vmul.f32 %v700, 0.5
    %v754 = vmul.f32 %v702, 0.5
    %v755 = vmul.f32 %v704, 0.5
    %v756 = vmul.f32 %v706, 0.5
    %v757 = vmul.f32 %v708, 0.5
    %v758 = vmul.f32 %v710, 0.5
    %v759 = vmul.f32 %v712, 0.5
    %v760 = vmul.f32 %v714, 0.5
    %v761 = vmul.f32 %v716, 0.5
    %v762 = vmul.f32 %v718, 0.5
    %v763 = vmul.f32 %v720, 0.5
    %v764 = vmul.f32 %v722, 0.5
    %v765 = vmul.f32 %v724, 0.5
    %v766 = vmul.f32 %v726, 0.5
    %v767 = vmul.f32 %v728, 0.5
    %v768 = vmul.f32 %v730, 0.5
    %v769 = vmul.f32 %v732, 0.5
    %v770 = vmul.f32 %v734, 0.5
    %v771 = vmul.f32 %v736, 0.5
    %v772 = vmul.f32 %v738, 0.5
    %v773 = vmul.f32 %v740, 0.5
    %v774 = vmul.f32 %v742, 0.5
    %v775 = vld [vmem:[%s1] sm:$0xff]
    %v776 = vld [vmem:[%s1 + $0x8] sm:$0xff]
    %v777 = vld [vmem:[%s1 + $0x10] sm:$0xff]
    %v778 = vld [vmem:[%s1 + $0x18] sm:$0xff]
    %v779 = vld [vmem:[%s1 + $0x20] sm:$0xff]
    %v780 = vld [vmem:[%s1 + $0x28] sm:$0xff]
    %v781 = vld [vmem:[%s1 + $0x30] sm:$0xff]
    %v782 = vld [vmem:[%s1 + $0x38] sm:$0xff]
    %v783 = vld [vmem:[%s1 + $0x40] sm:$0xff]
    %v784 = vld [vmem:[%s1 + $0x48] sm:$0xff]
    %v785 = vld [vmem:[%s1 + $0x50] sm:$0xff]
    %v786 = vld [vmem:[%s1 + $0x58] sm:$0xff]
    %v787 = vld [vmem:[%s1 + $0x60] sm:$0xff]
    %v788 = vld [vmem:[%s1 + $0x68] sm:$0xff]
    %v789 = vld [vmem:[%s1 + $0x70] sm:$0xff]
    %v790 = vld [vmem:[%s1 + $0x78] sm:$0xff]
    %v791 = vld [vmem:[%s1 + $0x80] sm:$0xff]
    %v792 = vld [vmem:[%s1 + $0x88] sm:$0xff]
    %v793 = vld [vmem:[%s1 + $0x90] sm:$0xff]
    %v794 = vld [vmem:[%s1 + $0x98] sm:$0xff]
    %v795 = vld [vmem:[%s1 + $0xa0] sm:$0xff]
    %v796 = vld [vmem:[%s1 + $0xa8] sm:$0xff]
    %v797 = vld [vmem:[%s1 + $0xb0] sm:$0xff]
    %v798 = vld [vmem:[%s1 + $0xb8] sm:$0xff]
    %v799 = vld [vmem:[%s1 + $0xc0] sm:$0xff]
    %v800 = vld [vmem:[%s1 + $0xc8] sm:$0xff]
    %v801 = vld [vmem:[%s1 + $0xd0] sm:$0xff]
    %v802 = vld [vmem:[%s1 + $0xd8] sm:$0xff]
    %v803 = vld [vmem:[%s1 + $0xe0] sm:$0xff]
    %v804 = vld [vmem:[%s1 + $0xe8] sm:$0xff]
    %v805 = vld [vmem:[%s1 + $0xf0] sm:$0xff]
    %v806 = vld [vmem:[%s1 + $0xf8] sm:$0xff]
    %839 = vrot.lane.b32.xlu0 %v743, 112
    %v840 = vpop.permute.xlu0 %839
    %841 = vrot.lane.b32.xlu0 %v744, 112
    %v842 = vpop.permute.xlu0 %841
    %843 = vrot.lane.b32.xlu0 %v745, 112
    %v844 = vpop.permute.xlu0 %843
    %845 = vrot.lane.b32.xlu0 %v746, 112
    %v846 = vpop.permute.xlu0 %845
    %847 = vrot.lane.b32.xlu0 %v747, 112
    %v848 = vpop.permute.xlu0 %847
    %849 = vrot.lane.b32.xlu0 %v748, 112
    %v850 = vpop.permute.xlu0 %849
    %851 = vrot.lane.b32.xlu0 %v749, 112
    %v852 = vpop.permute.xlu0 %851
    %853 = vrot.lane.b32.xlu0 %v750, 112
    %v854 = vpop.permute.xlu0 %853
    %855 = vrot.lane.b32.xlu0 %v751, 112
    %v856 = vpop.permute.xlu0 %855
    %857 = vrot.lane.b32.xlu0 %v752, 112
    %v858 = vpop.permute.xlu0 %857
    %859 = vrot.lane.b32.xlu0 %v753, 112
    %v860 = vpop.permute.xlu0 %859
    %861 = vrot.lane.b32.xlu0 %v754, 112
    %v862 = vpop.permute.xlu0 %861
    %863 = vrot.lane.b32.xlu0 %v755, 112
    %v864 = vpop.permute.xlu0 %863
    %865 = vrot.lane.b32.xlu0 %v756, 112
    %v866 = vpop.permute.xlu0 %865
    %867 = vrot.lane.b32.xlu0 %v757, 112
    %v868 = vpop.permute.xlu0 %867
    %869 = vrot.lane.b32.xlu0 %v758, 112
    %v870 = vpop.permute.xlu0 %869
    %871 = vrot.lane.b32.xlu0 %v759, 112
    %v872 = vpop.permute.xlu0 %871
    %873 = vrot.lane.b32.xlu0 %v760, 112
    %v874 = vpop.permute.xlu0 %873
    %875 = vrot.lane.b32.xlu0 %v761, 112
    %v876 = vpop.permute.xlu0 %875
    %877 = vrot.lane.b32.xlu0 %v762, 112
    %v878 = vpop.permute.xlu0 %877
    %879 = vrot.lane.b32.xlu0 %v763, 112
    %v880 = vpop.permute.xlu0 %879
    %881 = vrot.lane.b32.xlu0 %v764, 112
    %v882 = vpop.permute.xlu0 %881
    %883 = vrot.lane.b32.xlu0 %v765, 112
    %v884 = vpop.permute.xlu0 %883
    %885 = vrot.lane.b32.xlu0 %v766, 112
    %v886 = vpop.permute.xlu0 %885
    %887 = vrot.lane.b32.xlu0 %v767, 112
    %v888 = vpop.permute.xlu0 %887
    %889 = vrot.lane.b32.xlu0 %v768, 112
    %v890 = vpop.permute.xlu0 %889
    %891 = vrot.lane.b32.xlu0 %v769, 112
    %v892 = vpop.permute.xlu0 %891
    %893 = vrot.lane.b32.xlu0 %v770, 112
    %v894 = vpop.permute.xlu0 %893
    %895 = vrot.lane.b32.xlu0 %v771, 112
    %v896 = vpop.permute.xlu0 %895
    %897 = vrot.lane.b32.xlu0 %v772, 112
    %v898 = vpop.permute.xlu0 %897
    %899 = vrot.lane.b32.xlu0 %v773, 112
    %v900 = vpop.permute.xlu0 %899
    %901 = vrot.lane.b32.xlu0 %v774, 112
    %v902 = vpop.permute.xlu0 %901
    %v935 = vmul.f32 %v775, %v840
    %v936 = vmul.f32 %v776, %v842
    %v937 = vmul.f32 %v777, %v844
    %v938 = vmul.f32 %v778, %v846
    %v939 = vmul.f32 %v779, %v848
    %v940 = vmul.f32 %v780, %v850
    %v941 = vmul.f32 %v781, %v852
    %v942 = vmul.f32 %v782, %v854
    %v943 = vmul.f32 %v783, %v856
    %v944 = vmul.f32 %v784, %v858
    %v945 = vmul.f32 %v785, %v860
    %v946 = vmul.f32 %v786, %v862
    %v947 = vmul.f32 %v787, %v864
    %v948 = vmul.f32 %v788, %v866
    %v949 = vmul.f32 %v789, %v868
    %v950 = vmul.f32 %v790, %v870
    %v951 = vmul.f32 %v791, %v872
    %v952 = vmul.f32 %v792, %v874
    %v953 = vmul.f32 %v793, %v876
    %v954 = vmul.f32 %v794, %v878
    %v955 = vmul.f32 %v795, %v880
    %v956 = vmul.f32 %v796, %v882
    %v957 = vmul.f32 %v797, %v884
    %v958 = vmul.f32 %v798, %v886
    %v959 = vmul.f32 %v799, %v888
    %v960 = vmul.f32 %v800, %v890
    %v961 = vmul.f32 %v801, %v892
    %v962 = vmul.f32 %v802, %v894
    %v963 = vmul.f32 %v803, %v896
    %v964 = vmul.f32 %v804, %v898
    %v965 = vmul.f32 %v805, %v900
    %v966 = vmul.f32 %v806, %v902
    %v967 = vadd.f32 %v935, %v553
    %v968 = vadd.f32 %v936, %v556
    %v969 = vadd.f32 %v937, %v561
    %v970 = vadd.f32 %v938, %v564
    %v971 = vadd.f32 %v939, %v569
    %v972 = vadd.f32 %v940, %v572
    %v973 = vadd.f32 %v941, %v577
    %v974 = vadd.f32 %v942, %v580
    %v975 = vadd.f32 %v943, %v585
    %v976 = vadd.f32 %v944, %v588
    %v977 = vadd.f32 %v945, %v593
    %v978 = vadd.f32 %v946, %v596
    %v979 = vadd.f32 %v947, %v601
    %v980 = vadd.f32 %v948, %v604
    %v981 = vadd.f32 %v949, %v609
    %v982 = vadd.f32 %v950, %v612
    %v983 = vadd.f32 %v951, %v617
    %v984 = vadd.f32 %v952, %v620
    %v985 = vadd.f32 %v953, %v625
    %v986 = vadd.f32 %v954, %v628
    %v987 = vadd.f32 %v955, %v633
    %v988 = vadd.f32 %v956, %v636
    %v989 = vadd.f32 %v957, %v641
    %v990 = vadd.f32 %v958, %v644
    %v991 = vadd.f32 %v959, %v649
    %v992 = vadd.f32 %v960, %v652
    %v993 = vadd.f32 %v961, %v657
    %v994 = vadd.f32 %v962, %v660
    %v995 = vadd.f32 %v963, %v665
    %v996 = vadd.f32 %v964, %v668
    %v997 = vadd.f32 %v965, %v673
    %v998 = vadd.f32 %v966, %v676
    %v999 = vpack.c.bf16 %v968, %v967
    %v1000 = vpack.c.bf16 %v970, %v969
    %v1001 = vpack.c.bf16 %v972, %v971
    %v1002 = vpack.c.bf16 %v974, %v973
    %v1003 = vpack.c.bf16 %v976, %v975
    %v1004 = vpack.c.bf16 %v978, %v977
    %v1005 = vpack.c.bf16 %v980, %v979
    %v1006 = vpack.c.bf16 %v982, %v981
    %v1007 = vpack.c.bf16 %v984, %v983
    %v1008 = vpack.c.bf16 %v986, %v985
    %v1009 = vpack.c.bf16 %v988, %v987
    %v1010 = vpack.c.bf16 %v990, %v989
    %v1011 = vpack.c.bf16 %v992, %v991
    %v1012 = vpack.c.bf16 %v994, %v993
    %v1013 = vpack.c.bf16 %v996, %v995
    %v1014 = vpack.c.bf16 %v998, %v997
    %v1015 = vld [vmem:[%s6] sm:$0xf]
    %v1016 = vld [vmem:[%s6 + $0x4] sm:$0xf]
    %v1017 = vld [vmem:[%s7] sm:$0x1]
    %v1019 = vlaneseq
    %v1020 = vshrl.u32 %v1019, 7
    %v1021 = vsub.s32 0, %v1020
    %v1022 = vrot.slane %v1017, %v1021
    %v1026 = vunpack.c.l.b16 %v1015
    %v1027 = vunpack.c.l.b16 %v1016
    %v1028 = vpack.c.b16 %v1027, %v1026
    %vm1030 = vcmask 130048
    %v1032 = vsel %vm1030, %v999, 0
    %v1035 = vsel %vm1030, %v1000, 0
    %v1038 = vsel %vm1030, %v1001, 0
    %v1041 = vsel %vm1030, %v1002, 0
    %v1044 = vsel %vm1030, %v1003, 0
    %v1047 = vsel %vm1030, %v1004, 0
    %v1050 = vsel %vm1030, %v1005, 0
    %v1053 = vsel %vm1030, %v1006, 0
    %v1056 = vsel %vm1030, %v1007, 0
    %v1059 = vsel %vm1030, %v1008, 0
    %v1062 = vsel %vm1030, %v1009, 0
    %v1065 = vsel %vm1030, %v1010, 0
    %v1068 = vsel %vm1030, %v1011, 0
    %v1071 = vsel %vm1030, %v1012, 0
    %v1074 = vsel %vm1030, %v1013, 0
    %v1077 = vsel %vm1030, %v1014, 0
    %1079 = vmatprep.subr.bf16.mxu0 0
    %1080 = vmatpush1.bf16.msra.mxu0 %v1028
    %1081 = vmatprep.subr.bf16.mxu0 0
    %1082 = vmatpush1.bf16.msra.mxu0 0
    %1083 = vmatprep.subr.bf16.mxu0 0
    %1084 = vmatpush1.bf16.msra.mxu0 0
    %1085 = vmatprep.subr.bf16.mxu0 0
    %1086 = vmatpush1.bf16.msra.mxu0 0
    %1087 = vmatprep.subr.bf16.mxu0 0
    %1088 = vmatpush1.bf16.msra.mxu0 0
    %1089 = vmatprep.subr.bf16.mxu0 0
    %1090 = vmatpush1.bf16.msra.mxu0 0
    %1091 = vmatprep.subr.bf16.mxu0 0
    %1092 = vmatpush1.bf16.msra.mxu0 0
    %1093 = vmatprep.subr.bf16.mxu0 0
    %1094 = vmatpush1.bf16.msra.mxu0 0
    %1095 = vmatprep.subr.bf16.mxu0 0
    %1096 = vmatpush1.bf16.msra.mxu0 0
    %1097 = vmatprep.subr.bf16.mxu0 0
    %1098 = vmatpush1.bf16.msra.mxu0 0
    %1099 = vmatprep.subr.bf16.mxu0 0
    %1100 = vmatpush1.bf16.msra.mxu0 0
    %1101 = vmatprep.subr.bf16.mxu0 0
    %1102 = vmatpush1.bf16.msra.mxu0 0
    %1103 = vmatprep.subr.bf16.mxu0 0
    %1104 = vmatpush1.bf16.msra.mxu0 0
    %1105 = vmatprep.subr.bf16.mxu0 0
    %1106 = vmatpush1.bf16.msra.mxu0 0
    %1107 = vmatprep.subr.bf16.mxu0 0
    %1108 = vmatpush1.bf16.msra.mxu0 0
    %1109 = vmatprep.subr.bf16.mxu0 0
    %1110 = vmatpush1.bf16.msra.mxu0 0
    %1111 = vmatprep.mubr.bf16.mxu0 0
    %1112 = vmatmul.mubr.bf16.gmra.mrb[0].mxu0 %v1032
    %v1113 = vpop.f32.mrb[0].mxu0
    %v1114 = vadd.f32 %v1022, %v1113
    %v1115 = vpop.f32.mrb[0].mxu0
    %v1116 = vpop.f32.mrb[0].mxu0
    %v1117 = vadd.f32 %v1022, %v1116
    %v1118 = vpop.f32.mrb[0].mxu0
    %1119 = vmatprep.mubr.bf16.mxu0 0
    %1120 = vmatmul.mubr.bf16.gmra.mrb[0].mxu0 %v1035
    %v1121 = vpop.f32.mrb[0].mxu0
    %v1122 = vadd.f32 %v1022, %v1121
    %v1123 = vpop.f32.mrb[0].mxu0
    %v1124 = vpop.f32.mrb[0].mxu0
    %v1125 = vadd.f32 %v1022, %v1124
    %v1126 = vpop.f32.mrb[0].mxu0
    %1127 = vmatprep.mubr.bf16.mxu0 0
    %1128 = vmatmul.mubr.bf16.gmra.mrb[0].mxu0 %v1038
    %v1129 = vpop.f32.mrb[0].mxu0
    %v1130 = vadd.f32 %v1022, %v1129
    %v1131 = vpop.f32.mrb[0].mxu0
    %v1132 = vpop.f32.mrb[0].mxu0
    %v1133 = vadd.f32 %v1022, %v1132
    %v1134 = vpop.f32.mrb[0].mxu0
    %1135 = vmatprep.mubr.bf16.mxu0 0
    %1136 = vmatmul.mubr.bf16.gmra.mrb[0].mxu0 %v1041
    %v1137 = vpop.f32.mrb[0].mxu0
    %v1138 = vadd.f32 %v1022, %v1137
    %v1139 = vpop.f32.mrb[0].mxu0
    %v1140 = vpop.f32.mrb[0].mxu0
    %v1141 = vadd.f32 %v1022, %v1140
    %v1142 = vpop.f32.mrb[0].mxu0
    %1143 = vmatprep.mubr.bf16.mxu0 0
    %1144 = vmatmul.mubr.bf16.gmra.mrb[0].mxu0 %v1044
    %v1145 = vpop.f32.mrb[0].mxu0
    %v1146 = vadd.f32 %v1022, %v1145
    %v1147 = vpop.f32.mrb[0].mxu0
    %v1148 = vpop.f32.mrb[0].mxu0
    %v1149 = vadd.f32 %v1022, %v1148
    %v1150 = vpop.f32.mrb[0].mxu0
    %1151 = vmatprep.mubr.bf16.mxu0 0
    %1152 = vmatmul.mubr.bf16.gmra.mrb[0].mxu0 %v1047
    %v1153 = vpop.f32.mrb[0].mxu0
    %v1154 = vadd.f32 %v1022, %v1153
    %v1155 = vpop.f32.mrb[0].mxu0
    %v1156 = vpop.f32.mrb[0].mxu0
    %v1157 = vadd.f32 %v1022, %v1156
    %v1158 = vpop.f32.mrb[0].mxu0
    %1159 = vmatprep.mubr.bf16.mxu0 0
    %1160 = vmatmul.mubr.bf16.gmra.mrb[0].mxu0 %v1050
    %v1161 = vpop.f32.mrb[0].mxu0
    %v1162 = vadd.f32 %v1022, %v1161
    %v1163 = vpop.f32.mrb[0].mxu0
    %v1164 = vpop.f32.mrb[0].mxu0
    %v1165 = vadd.f32 %v1022, %v1164
    %v1166 = vpop.f32.mrb[0].mxu0
    %1167 = vmatprep.mubr.bf16.mxu0 0
    %1168 = vmatmul.mubr.bf16.gmra.mrb[0].mxu0 %v1053
    %v1169 = vpop.f32.mrb[0].mxu0
    %v1170 = vadd.f32 %v1022, %v1169
    %v1171 = vpop.f32.mrb[0].mxu0
    %v1172 = vpop.f32.mrb[0].mxu0
    %v1173 = vadd.f32 %v1022, %v1172
    %v1174 = vpop.f32.mrb[0].mxu0
    %1175 = vmatprep.mubr.bf16.mxu0 0
    %1176 = vmatmul.mubr.bf16.gmra.mrb[0].mxu0 %v1056
    %v1177 = vpop.f32.mrb[0].mxu0
    %v1178 = vadd.f32 %v1022, %v1177
    %v1179 = vpop.f32.mrb[0].mxu0
    %v1180 = vpop.f32.mrb[0].mxu0
    %v1181 = vadd.f32 %v1022, %v1180
    %v1182 = vpop.f32.mrb[0].mxu0
    %1183 = vmatprep.mubr.bf16.mxu0 0
    %1184 = vmatmul.mubr.bf16.gmra.mrb[0].mxu0 %v1059
    %v1185 = vpop.f32.mrb[0].mxu0
    %v1186 = vadd.f32 %v1022, %v1185
    %v1187 = vpop.f32.mrb[0].mxu0
    %v1188 = vpop.f32.mrb[0].mxu0
    %v1189 = vadd.f32 %v1022, %v1188
    %v1190 = vpop.f32.mrb[0].mxu0
    %1191 = vmatprep.mubr.bf16.mxu0 0
    %1192 = vmatmul.mubr.bf16.gmra.mrb[0].mxu0 %v1062
    %v1193 = vpop.f32.mrb[0].mxu0
    %v1194 = vadd.f32 %v1022, %v1193
    %v1195 = vpop.f32.mrb[0].mxu0
    %v1196 = vpop.f32.mrb[0].mxu0
    %v1197 = vadd.f32 %v1022, %v1196
    %v1198 = vpop.f32.mrb[0].mxu0
    %1199 = vmatprep.mubr.bf16.mxu0 0
    %1200 = vmatmul.mubr.bf16.gmra.mrb[0].mxu0 %v1065
    %v1201 = vpop.f32.mrb[0].mxu0
    %v1202 = vadd.f32 %v1022, %v1201
    %v1203 = vpop.f32.mrb[0].mxu0
    %v1204 = vpop.f32.mrb[0].mxu0
    %v1205 = vadd.f32 %v1022, %v1204
    %v1206 = vpop.f32.mrb[0].mxu0
    %1207 = vmatprep.mubr.bf16.mxu0 0
    %1208 = vmatmul.mubr.bf16.gmra.mrb[0].mxu0 %v1068
    %v1209 = vpop.f32.mrb[0].mxu0
    %v1210 = vadd.f32 %v1022, %v1209
    %v1211 = vpop.f32.mrb[0].mxu0
    %v1212 = vpop.f32.mrb[0].mxu0
    %v1213 = vadd.f32 %v1022, %v1212
    %v1214 = vpop.f32.mrb[0].mxu0
    %1215 = vmatprep.mubr.bf16.mxu0 0
    %1216 = vmatmul.mubr.bf16.gmra.mrb[0].mxu0 %v1071
    %v1217 = vpop.f32.mrb[0].mxu0
    %v1218 = vadd.f32 %v1022, %v1217
    %v1219 = vpop.f32.mrb[0].mxu0
    %v1220 = vpop.f32.mrb[0].mxu0
    %v1221 = vadd.f32 %v1022, %v1220
    %v1222 = vpop.f32.mrb[0].mxu0
    %1223 = vmatprep.mubr.bf16.mxu0 0
    %1224 = vmatmul.mubr.bf16.gmra.mrb[0].mxu0 %v1074
    %v1225 = vpop.f32.mrb[0].mxu0
    %v1226 = vadd.f32 %v1022, %v1225
    %v1227 = vpop.f32.mrb[0].mxu0
    %v1228 = vpop.f32.mrb[0].mxu0
    %v1229 = vadd.f32 %v1022, %v1228
    %v1230 = vpop.f32.mrb[0].mxu0
    %1231 = vmatprep.mubr.bf16.mxu0 0
    %1232 = vmatmul.mubr.bf16.gmra.mrb[0].mxu0 %v1077
    %v1233 = vpop.f32.mrb[0].mxu0
    %v1234 = vadd.f32 %v1022, %v1233
    %v1235 = vpop.f32.mrb[0].mxu0
    %v1236 = vpop.f32.mrb[0].mxu0
    %v1237 = vadd.f32 %v1022, %v1236
    %v1238 = vpop.f32.mrb[0].mxu0
    %1239 = vdwg.mxu0
    %v1240 = vmax.f32 %v1114, 0.0
    %v1241 = vmax.f32 %v1117, 0.0
    %v1242 = vmax.f32 %v1122, 0.0
    %v1243 = vmax.f32 %v1125, 0.0
    %v1244 = vmax.f32 %v1130, 0.0
    %v1245 = vmax.f32 %v1133, 0.0
    %v1246 = vmax.f32 %v1138, 0.0
    %v1247 = vmax.f32 %v1141, 0.0
    %v1248 = vmax.f32 %v1146, 0.0
    %v1249 = vmax.f32 %v1149, 0.0
    %v1250 = vmax.f32 %v1154, 0.0
    %v1251 = vmax.f32 %v1157, 0.0
    %v1252 = vmax.f32 %v1162, 0.0
    %v1253 = vmax.f32 %v1165, 0.0
    %v1254 = vmax.f32 %v1170, 0.0
    %v1255 = vmax.f32 %v1173, 0.0
    %v1256 = vmax.f32 %v1178, 0.0
    %v1257 = vmax.f32 %v1181, 0.0
    %v1258 = vmax.f32 %v1186, 0.0
    %v1259 = vmax.f32 %v1189, 0.0
    %v1260 = vmax.f32 %v1194, 0.0
    %v1261 = vmax.f32 %v1197, 0.0
    %v1262 = vmax.f32 %v1202, 0.0
    %v1263 = vmax.f32 %v1205, 0.0
    %v1264 = vmax.f32 %v1210, 0.0
    %v1265 = vmax.f32 %v1213, 0.0
    %v1266 = vmax.f32 %v1218, 0.0
    %v1267 = vmax.f32 %v1221, 0.0
    %v1268 = vmax.f32 %v1226, 0.0
    %v1269 = vmax.f32 %v1229, 0.0
    %v1270 = vmax.f32 %v1234, 0.0
    %v1271 = vmax.f32 %v1237, 0.0
    %v1272 = vpack.c.bf16 %v1241, %v1240
    %v1273 = vpack.c.bf16 %v1243, %v1242
    %v1274 = vpack.c.bf16 %v1245, %v1244
    %v1275 = vpack.c.bf16 %v1247, %v1246
    %v1276 = vpack.c.bf16 %v1249, %v1248
    %v1277 = vpack.c.bf16 %v1251, %v1250
    %v1278 = vpack.c.bf16 %v1253, %v1252
    %v1279 = vpack.c.bf16 %v1255, %v1254
    %v1280 = vpack.c.bf16 %v1257, %v1256
    %v1281 = vpack.c.bf16 %v1259, %v1258
    %v1282 = vpack.c.bf16 %v1261, %v1260
    %v1283 = vpack.c.bf16 %v1263, %v1262
    %v1284 = vpack.c.bf16 %v1265, %v1264
    %v1285 = vpack.c.bf16 %v1267, %v1266
    %v1286 = vpack.c.bf16 %v1269, %v1268
    %v1287 = vpack.c.bf16 %v1271, %v1270
    %v1288 = vld [vmem:[%s8] sm:$0xf]
    %v1289 = vld [vmem:[%s8 + $0x4] sm:$0xf]
    %v1290 = vld [vmem:[%s8 + $0x8] sm:$0xf]
    %v1291 = vld [vmem:[%s8 + $0xc] sm:$0xf]
    %v1292 = vld [vmem:[%s9] sm:$0x1]
    %v1294 = vlaneseq
    %v1295 = vshrl.u32 %v1294, 7
    %v1296 = vsub.s32 0, %v1295
    %v1297 = vrot.slane %v1292, %v1296
    %v1303 = vunpack.c.l.b16 %v1288
    %v1304 = vunpack.c.l.b16 %v1289
    %v1305 = vunpack.c.l.b16 %v1290
    %v1306 = vunpack.c.l.b16 %v1291
    %v1307 = vpack.c.b16 %v1304, %v1303
    %v1308 = vpack.c.b16 %v1306, %v1305
    %v1312 = vsel %vm469, %v1272, 0
    %v1315 = vsel %vm469, %v1273, 0
    %v1318 = vsel %vm469, %v1274, 0
    %v1321 = vsel %vm469, %v1275, 0
    %v1324 = vsel %vm469, %v1276, 0
    %v1327 = vsel %vm469, %v1277, 0
    %v1330 = vsel %vm469, %v1278, 0
    %v1333 = vsel %vm469, %v1279, 0
    %v1336 = vsel %vm469, %v1280, 0
    %v1339 = vsel %vm469, %v1281, 0
    %v1342 = vsel %vm469, %v1282, 0
    %v1345 = vsel %vm469, %v1283, 0
    %v1348 = vsel %vm469, %v1284, 0
    %v1351 = vsel %vm469, %v1285, 0
    %v1354 = vsel %vm469, %v1286, 0
    %v1357 = vsel %vm469, %v1287, 0
    %1359 = vmatprep.subr.bf16.mxu0 0
    %1360 = vmatpush1.bf16.msra.mxu0 %v1307
    %1361 = vmatprep.subr.bf16.mxu0 0
    %1362 = vmatpush1.bf16.msra.mxu0 %v1308
    %1363 = vmatprep.subr.bf16.mxu0 0
    %1364 = vmatpush1.bf16.msra.mxu0 0
    %1365 = vmatprep.subr.bf16.mxu0 0
    %1366 = vmatpush1.bf16.msra.mxu0 0
    %1367 = vmatprep.subr.bf16.mxu0 0
    %1368 = vmatpush1.bf16.msra.mxu0 0
    %1369 = vmatprep.subr.bf16.mxu0 0
    %1370 = vmatpush1.bf16.msra.mxu0 0
    %1371 = vmatprep.subr.bf16.mxu0 0
    %1372 = vmatpush1.bf16.msra.mxu0 0
    %1373 = vmatprep.subr.bf16.mxu0 0
    %1374 = vmatpush1.bf16.msra.mxu0 0
    %1375 = vmatprep.subr.bf16.mxu0 0
    %1376 = vmatpush1.bf16.msra.mxu0 0
    %1377 = vmatprep.subr.bf16.mxu0 0
    %1378 = vmatpush1.bf16.msra.mxu0 0
    %1379 = vmatprep.subr.bf16.mxu0 0
    %1380 = vmatpush1.bf16.msra.mxu0 0
    %1381 = vmatprep.subr.bf16.mxu0 0
    %1382 = vmatpush1.bf16.msra.mxu0 0
    %1383 = vmatprep.subr.bf16.mxu0 0
    %1384 = vmatpush1.bf16.msra.mxu0 0
    %1385 = vmatprep.subr.bf16.mxu0 0
    %1386 = vmatpush1.bf16.msra.mxu0 0
    %1387 = vmatprep.subr.bf16.mxu0 0
    %1388 = vmatpush1.bf16.msra.mxu0 0
    %1389 = vmatprep.subr.bf16.mxu0 0
    %1390 = vmatpush1.bf16.msra.mxu0 0
    %1391 = vmatprep.mubr.bf16.mxu0 0
    %1392 = vmatmul.mubr.bf16.gmra.mrb[0].mxu0 %v1312
    %v1393 = vpop.f32.mrb[0].mxu0
    %v1394 = vadd.f32 %v1297, %v1393
    %v1395 = vpop.f32.mrb[0].mxu0
    %v1396 = vpop.f32.mrb[0].mxu0
    %v1397 = vadd.f32 %v1297, %v1396
    %v1398 = vpop.f32.mrb[0].mxu0
    %1399 = vmatprep.mubr.bf16.mxu0 0
    %1400 = vmatmul.mubr.bf16.gmra.mrb[0].mxu0 %v1315
    %v1401 = vpop.f32.mrb[0].mxu0
    %v1402 = vadd.f32 %v1297, %v1401
    %v1403 = vpop.f32.mrb[0].mxu0
    %v1404 = vpop.f32.mrb[0].mxu0
    %v1405 = vadd.f32 %v1297, %v1404
    %v1406 = vpop.f32.mrb[0].mxu0
    %1407 = vmatprep.mubr.bf16.mxu0 0
    %1408 = vmatmul.mubr.bf16.gmra.mrb[0].mxu0 %v1318
    %v1409 = vpop.f32.mrb[0].mxu0
    %v1410 = vadd.f32 %v1297, %v1409
    %v1411 = vpop.f32.mrb[0].mxu0
    %v1412 = vpop.f32.mrb[0].mxu0
    %v1413 = vadd.f32 %v1297, %v1412
    %v1414 = vpop.f32.mrb[0].mxu0
    %1415 = vmatprep.mubr.bf16.mxu0 0
    %1416 = vmatmul.mubr.bf16.gmra.mrb[0].mxu0 %v1321
    %v1417 = vpop.f32.mrb[0].mxu0
    %v1418 = vadd.f32 %v1297, %v1417
    %v1419 = vpop.f32.mrb[0].mxu0
    %v1420 = vpop.f32.mrb[0].mxu0
    %v1421 = vadd.f32 %v1297, %v1420
    %v1422 = vpop.f32.mrb[0].mxu0
    %1423 = vmatprep.mubr.bf16.mxu0 0
    %1424 = vmatmul.mubr.bf16.gmra.mrb[0].mxu0 %v1324
    %v1425 = vpop.f32.mrb[0].mxu0
    %v1426 = vadd.f32 %v1297, %v1425
    %v1427 = vpop.f32.mrb[0].mxu0
    %v1428 = vpop.f32.mrb[0].mxu0
    %v1429 = vadd.f32 %v1297, %v1428
    %v1430 = vpop.f32.mrb[0].mxu0
    %1431 = vmatprep.mubr.bf16.mxu0 0
    %1432 = vmatmul.mubr.bf16.gmra.mrb[0].mxu0 %v1327
    %v1433 = vpop.f32.mrb[0].mxu0
    %v1434 = vadd.f32 %v1297, %v1433
    %v1435 = vpop.f32.mrb[0].mxu0
    %v1436 = vpop.f32.mrb[0].mxu0
    %v1437 = vadd.f32 %v1297, %v1436
    %v1438 = vpop.f32.mrb[0].mxu0
    %1439 = vmatprep.mubr.bf16.mxu0 0
    %1440 = vmatmul.mubr.bf16.gmra.mrb[0].mxu0 %v1330
    %v1441 = vpop.f32.mrb[0].mxu0
    %v1442 = vadd.f32 %v1297, %v1441
    %v1443 = vpop.f32.mrb[0].mxu0
    %v1444 = vpop.f32.mrb[0].mxu0
    %v1445 = vadd.f32 %v1297, %v1444
    %v1446 = vpop.f32.mrb[0].mxu0
    %1447 = vmatprep.mubr.bf16.mxu0 0
    %1448 = vmatmul.mubr.bf16.gmra.mrb[0].mxu0 %v1333
    %v1449 = vpop.f32.mrb[0].mxu0
    %v1450 = vadd.f32 %v1297, %v1449
    %v1451 = vpop.f32.mrb[0].mxu0
    %v1452 = vpop.f32.mrb[0].mxu0
    %v1453 = vadd.f32 %v1297, %v1452
    %v1454 = vpop.f32.mrb[0].mxu0
    %1455 = vmatprep.mubr.bf16.mxu0 0
    %1456 = vmatmul.mubr.bf16.gmra.mrb[0].mxu0 %v1336
    %v1457 = vpop.f32.mrb[0].mxu0
    %v1458 = vadd.f32 %v1297, %v1457
    %v1459 = vpop.f32.mrb[0].mxu0
    %v1460 = vpop.f32.mrb[0].mxu0
    %v1461 = vadd.f32 %v1297, %v1460
    %v1462 = vpop.f32.mrb[0].mxu0
    %1463 = vmatprep.mubr.bf16.mxu0 0
    %1464 = vmatmul.mubr.bf16.gmra.mrb[0].mxu0 %v1339
    %v1465 = vpop.f32.mrb[0].mxu0
    %v1466 = vadd.f32 %v1297, %v1465
    %v1467 = vpop.f32.mrb[0].mxu0
    %v1468 = vpop.f32.mrb[0].mxu0
    %v1469 = vadd.f32 %v1297, %v1468
    %v1470 = vpop.f32.mrb[0].mxu0
    %1471 = vmatprep.mubr.bf16.mxu0 0
    %1472 = vmatmul.mubr.bf16.gmra.mrb[0].mxu0 %v1342
    %v1473 = vpop.f32.mrb[0].mxu0
    %v1474 = vadd.f32 %v1297, %v1473
    %v1475 = vpop.f32.mrb[0].mxu0
    %v1476 = vpop.f32.mrb[0].mxu0
    %v1477 = vadd.f32 %v1297, %v1476
    %v1478 = vpop.f32.mrb[0].mxu0
    %1479 = vmatprep.mubr.bf16.mxu0 0
    %1480 = vmatmul.mubr.bf16.gmra.mrb[0].mxu0 %v1345
    %v1481 = vpop.f32.mrb[0].mxu0
    %v1482 = vadd.f32 %v1297, %v1481
    %v1483 = vpop.f32.mrb[0].mxu0
    %v1484 = vpop.f32.mrb[0].mxu0
    %v1485 = vadd.f32 %v1297, %v1484
    %v1486 = vpop.f32.mrb[0].mxu0
    %1487 = vmatprep.mubr.bf16.mxu0 0
    %1488 = vmatmul.mubr.bf16.gmra.mrb[0].mxu0 %v1348
    %v1489 = vpop.f32.mrb[0].mxu0
    %v1490 = vadd.f32 %v1297, %v1489
    %v1491 = vpop.f32.mrb[0].mxu0
    %v1492 = vpop.f32.mrb[0].mxu0
    %v1493 = vadd.f32 %v1297, %v1492
    %v1494 = vpop.f32.mrb[0].mxu0
    %1495 = vmatprep.mubr.bf16.mxu0 0
    %1496 = vmatmul.mubr.bf16.gmra.mrb[0].mxu0 %v1351
    %v1497 = vpop.f32.mrb[0].mxu0
    %v1498 = vadd.f32 %v1297, %v1497
    %v1499 = vpop.f32.mrb[0].mxu0
    %v1500 = vpop.f32.mrb[0].mxu0
    %v1501 = vadd.f32 %v1297, %v1500
    %v1502 = vpop.f32.mrb[0].mxu0
    %1503 = vmatprep.mubr.bf16.mxu0 0
    %1504 = vmatmul.mubr.bf16.gmra.mrb[0].mxu0 %v1354
    %v1505 = vpop.f32.mrb[0].mxu0
    %v1506 = vadd.f32 %v1297, %v1505
    %v1507 = vpop.f32.mrb[0].mxu0
    %v1508 = vpop.f32.mrb[0].mxu0
    %v1509 = vadd.f32 %v1297, %v1508
    %v1510 = vpop.f32.mrb[0].mxu0
    %1511 = vmatprep.mubr.bf16.mxu0 0
    %1512 = vmatmul.mubr.bf16.gmra.mrb[0].mxu0 %v1357
    %v1513 = vpop.f32.mrb[0].mxu0
    %v1514 = vadd.f32 %v1297, %v1513
    %v1515 = vpop.f32.mrb[0].mxu0
    %v1516 = vpop.f32.mrb[0].mxu0
    %v1517 = vadd.f32 %v1297, %v1516
    %v1518 = vpop.f32.mrb[0].mxu0
    %1519 = vdwg.mxu0
    %v1520 = vxor.u32 %v1394, 2147483648
    %v1521 = vxor.u32 %v1397, 2147483648
    %v1522 = vxor.u32 %v1402, 2147483648
    %v1523 = vxor.u32 %v1405, 2147483648
    %v1524 = vxor.u32 %v1410, 2147483648
    %v1525 = vxor.u32 %v1413, 2147483648
    %v1526 = vxor.u32 %v1418, 2147483648
    %v1527 = vxor.u32 %v1421, 2147483648
    %v1528 = vxor.u32 %v1426, 2147483648
    %v1529 = vxor.u32 %v1429, 2147483648
    %v1530 = vxor.u32 %v1434, 2147483648
    %v1531 = vxor.u32 %v1437, 2147483648
    %v1532 = vxor.u32 %v1442, 2147483648
    %v1533 = vxor.u32 %v1445, 2147483648
    %v1534 = vxor.u32 %v1450, 2147483648
    %v1535 = vxor.u32 %v1453, 2147483648
    %v1536 = vxor.u32 %v1458, 2147483648
    %v1537 = vxor.u32 %v1461, 2147483648
    %v1538 = vxor.u32 %v1466, 2147483648
    %v1539 = vxor.u32 %v1469, 2147483648
    %v1540 = vxor.u32 %v1474, 2147483648
    %v1541 = vxor.u32 %v1477, 2147483648
    %v1542 = vxor.u32 %v1482, 2147483648
    %v1543 = vxor.u32 %v1485, 2147483648
    %v1544 = vxor.u32 %v1490, 2147483648
    %v1545 = vxor.u32 %v1493, 2147483648
    %v1546 = vxor.u32 %v1498, 2147483648
    %v1547 = vxor.u32 %v1501, 2147483648
    %v1548 = vxor.u32 %v1506, 2147483648
    %v1549 = vxor.u32 %v1509, 2147483648
    %v1550 = vxor.u32 %v1514, 2147483648
    %v1551 = vxor.u32 %v1517, 2147483648
    %v1552 = vmul.f32 %v1520, 1.442695
    %v1553 = vpow.pop %v1552
    %v1554 = vmul.f32 %v1521, 1.442695
    %v1555 = vpow.pop %v1554
    %v1556 = vmul.f32 %v1522, 1.442695
    %v1557 = vpow.pop %v1556
    %v1558 = vmul.f32 %v1523, 1.442695
    %v1559 = vpow.pop %v1558
    %v1560 = vmul.f32 %v1524, 1.442695
    %v1561 = vpow.pop %v1560
    %v1562 = vmul.f32 %v1525, 1.442695
    %v1563 = vpow.pop %v1562
    %v1564 = vmul.f32 %v1526, 1.442695
    %v1565 = vpow.pop %v1564
    %v1566 = vmul.f32 %v1527, 1.442695
    %v1567 = vpow.pop %v1566
    %v1568 = vmul.f32 %v1528, 1.442695
    %v1569 = vpow.pop %v1568
    %v1570 = vmul.f32 %v1529, 1.442695
    %v1571 = vpow.pop %v1570
    %v1572 = vmul.f32 %v1530, 1.442695
    %v1573 = vpow.pop %v1572
    %v1574 = vmul.f32 %v1531, 1.442695
    %v1575 = vpow.pop %v1574
    %v1576 = vmul.f32 %v1532, 1.442695
    %v1577 = vpow.pop %v1576
    %v1578 = vmul.f32 %v1533, 1.442695
    %v1579 = vpow.pop %v1578
    %v1580 = vmul.f32 %v1534, 1.442695
    %v1581 = vpow.pop %v1580
    %v1582 = vmul.f32 %v1535, 1.442695
    %v1583 = vpow.pop %v1582
    %v1584 = vmul.f32 %v1536, 1.442695
    %v1585 = vpow.pop %v1584
    %v1586 = vmul.f32 %v1537, 1.442695
    %v1587 = vpow.pop %v1586
    %v1588 = vmul.f32 %v1538, 1.442695
    %v1589 = vpow.pop %v1588
    %v1590 = vmul.f32 %v1539, 1.442695
    %v1591 = vpow.pop %v1590
    %v1592 = vmul.f32 %v1540, 1.442695
    %v1593 = vpow.pop %v1592
    %v1594 = vmul.f32 %v1541, 1.442695
    %v1595 = vpow.pop %v1594
    %v1596 = vmul.f32 %v1542, 1.442695
    %v1597 = vpow.pop %v1596
    %v1598 = vmul.f32 %v1543, 1.442695
    %v1599 = vpow.pop %v1598
    %v1600 = vmul.f32 %v1544, 1.442695
    %v1601 = vpow.pop %v1600
    %v1602 = vmul.f32 %v1545, 1.442695
    %v1603 = vpow.pop %v1602
    %v1604 = vmul.f32 %v1546, 1.442695
    %v1605 = vpow.pop %v1604
    %v1606 = vmul.f32 %v1547, 1.442695
    %v1607 = vpow.pop %v1606
    %v1608 = vmul.f32 %v1548, 1.442695
    %v1609 = vpow.pop %v1608
    %v1610 = vmul.f32 %v1549, 1.442695
    %v1611 = vpow.pop %v1610
    %v1612 = vmul.f32 %v1550, 1.442695
    %v1613 = vpow.pop %v1612
    %v1614 = vmul.f32 %v1551, 1.442695
    %v1615 = vpow.pop %v1614
    %v1616 = vadd.f32 %v1553, 1.0
    %v1617 = vadd.f32 %v1555, 1.0
    %v1618 = vadd.f32 %v1557, 1.0
    %v1619 = vadd.f32 %v1559, 1.0
    %v1620 = vadd.f32 %v1561, 1.0
    %v1621 = vadd.f32 %v1563, 1.0
    %v1622 = vadd.f32 %v1565, 1.0
    %v1623 = vadd.f32 %v1567, 1.0
    %v1624 = vadd.f32 %v1569, 1.0
    %v1625 = vadd.f32 %v1571, 1.0
    %v1626 = vadd.f32 %v1573, 1.0
    %v1627 = vadd.f32 %v1575, 1.0
    %v1628 = vadd.f32 %v1577, 1.0
    %v1629 = vadd.f32 %v1579, 1.0
    %v1630 = vadd.f32 %v1581, 1.0
    %v1631 = vadd.f32 %v1583, 1.0
    %v1632 = vadd.f32 %v1585, 1.0
    %v1633 = vadd.f32 %v1587, 1.0
    %v1634 = vadd.f32 %v1589, 1.0
    %v1635 = vadd.f32 %v1591, 1.0
    %v1636 = vadd.f32 %v1593, 1.0
    %v1637 = vadd.f32 %v1595, 1.0
    %v1638 = vadd.f32 %v1597, 1.0
    %v1639 = vadd.f32 %v1599, 1.0
    %v1640 = vadd.f32 %v1601, 1.0
    %v1641 = vadd.f32 %v1603, 1.0
    %v1642 = vadd.f32 %v1605, 1.0
    %v1643 = vadd.f32 %v1607, 1.0
    %v1644 = vadd.f32 %v1609, 1.0
    %v1645 = vadd.f32 %v1611, 1.0
    %v1646 = vadd.f32 %v1613, 1.0
    %v1647 = vadd.f32 %v1615, 1.0
    %v1648 = vrcp.pop %v1616
    %v1649 = vmul.f32 1.0, %v1648
    %v1650 = vrcp.pop %v1617
    %v1651 = vmul.f32 1.0, %v1650
    %v1652 = vrcp.pop %v1618
    %v1653 = vmul.f32 1.0, %v1652
    %v1654 = vrcp.pop %v1619
    %v1655 = vmul.f32 1.0, %v1654
    %v1656 = vrcp.pop %v1620
    %v1657 = vmul.f32 1.0, %v1656
    %v1658 = vrcp.pop %v1621
    %v1659 = vmul.f32 1.0, %v1658
    %v1660 = vrcp.pop %v1622
    %v1661 = vmul.f32 1.0, %v1660
    %v1662 = vrcp.pop %v1623
    %v1663 = vmul.f32 1.0, %v1662
    %v1664 = vrcp.pop %v1624
    %v1665 = vmul.f32 1.0, %v1664
    %v1666 = vrcp.pop %v1625
    %v1667 = vmul.f32 1.0, %v1666
    %v1668 = vrcp.pop %v1626
    %v1669 = vmul.f32 1.0, %v1668
    %v1670 = vrcp.pop %v1627
    %v1671 = vmul.f32 1.0, %v1670
    %v1672 = vrcp.pop %v1628
    %v1673 = vmul.f32 1.0, %v1672
    %v1674 = vrcp.pop %v1629
    %v1675 = vmul.f32 1.0, %v1674
    %v1676 = vrcp.pop %v1630
    %v1677 = vmul.f32 1.0, %v1676
    %v1678 = vrcp.pop %v1631
    %v1679 = vmul.f32 1.0, %v1678
    %v1680 = vrcp.pop %v1632
    %v1681 = vmul.f32 1.0, %v1680
    %v1682 = vrcp.pop %v1633
    %v1683 = vmul.f32 1.0, %v1682
    %v1684 = vrcp.pop %v1634
    %v1685 = vmul.f32 1.0, %v1684
    %v1686 = vrcp.pop %v1635
    %v1687 = vmul.f32 1.0, %v1686
    %v1688 = vrcp.pop %v1636
    %v1689 = vmul.f32 1.0, %v1688
    %v1690 = vrcp.pop %v1637
    %v1691 = vmul.f32 1.0, %v1690
    %v1692 = vrcp.pop %v1638
    %v1693 = vmul.f32 1.0, %v1692
    %v1694 = vrcp.pop %v1639
    %v1695 = vmul.f32 1.0, %v1694
    %v1696 = vrcp.pop %v1640
    %v1697 = vmul.f32 1.0, %v1696
    %v1698 = vrcp.pop %v1641
    %v1699 = vmul.f32 1.0, %v1698
    %v1700 = vrcp.pop %v1642
    %v1701 = vmul.f32 1.0, %v1700
    %v1702 = vrcp.pop %v1643
    %v1703 = vmul.f32 1.0, %v1702
    %v1704 = vrcp.pop %v1644
    %v1705 = vmul.f32 1.0, %v1704
    %v1706 = vrcp.pop %v1645
    %v1707 = vmul.f32 1.0, %v1706
    %v1708 = vrcp.pop %v1646
    %v1709 = vmul.f32 1.0, %v1708
    %v1710 = vrcp.pop %v1647
    %v1711 = vmul.f32 1.0, %v1710
    %1744 = vrot.lane.b32.xlu0 %v553, 64
    %v1745 = vpop.permute.xlu0 %1744
    %1746 = vrot.lane.b32.xlu0 %v556, 64
    %v1747 = vpop.permute.xlu0 %1746
    %1748 = vrot.lane.b32.xlu0 %v561, 64
    %v1749 = vpop.permute.xlu0 %1748
    %1750 = vrot.lane.b32.xlu0 %v564, 64
    %v1751 = vpop.permute.xlu0 %1750
    %1752 = vrot.lane.b32.xlu0 %v569, 64
    %v1753 = vpop.permute.xlu0 %1752
    %1754 = vrot.lane.b32.xlu0 %v572, 64
    %v1755 = vpop.permute.xlu0 %1754
    %1756 = vrot.lane.b32.xlu0 %v577, 64
    %v1757 = vpop.permute.xlu0 %1756
    %1758 = vrot.lane.b32.xlu0 %v580, 64
    %v1759 = vpop.permute.xlu0 %1758
    %1760 = vrot.lane.b32.xlu0 %v585, 64
    %v1761 = vpop.permute.xlu0 %1760
    %1762 = vrot.lane.b32.xlu0 %v588, 64
    %v1763 = vpop.permute.xlu0 %1762
    %1764 = vrot.lane.b32.xlu0 %v593, 64
    %v1765 = vpop.permute.xlu0 %1764
    %1766 = vrot.lane.b32.xlu0 %v596, 64
    %v1767 = vpop.permute.xlu0 %1766
    %1768 = vrot.lane.b32.xlu0 %v601, 64
    %v1769 = vpop.permute.xlu0 %1768
    %1770 = vrot.lane.b32.xlu0 %v604, 64
    %v1771 = vpop.permute.xlu0 %1770
    %1772 = vrot.lane.b32.xlu0 %v609, 64
    %v1773 = vpop.permute.xlu0 %1772
    %1774 = vrot.lane.b32.xlu0 %v612, 64
    %v1775 = vpop.permute.xlu0 %1774
    %1776 = vrot.lane.b32.xlu0 %v617, 64
    %v1777 = vpop.permute.xlu0 %1776
    %1778 = vrot.lane.b32.xlu0 %v620, 64
    %v1779 = vpop.permute.xlu0 %1778
    %1780 = vrot.lane.b32.xlu0 %v625, 64
    %v1781 = vpop.permute.xlu0 %1780
    %1782 = vrot.lane.b32.xlu0 %v628, 64
    %v1783 = vpop.permute.xlu0 %1782
    %1784 = vrot.lane.b32.xlu0 %v633, 64
    %v1785 = vpop.permute.xlu0 %1784
    %1786 = vrot.lane.b32.xlu0 %v636, 64
    %v1787 = vpop.permute.xlu0 %1786
    %1788 = vrot.lane.b32.xlu0 %v641, 64
    %v1789 = vpop.permute.xlu0 %1788
    %1790 = vrot.lane.b32.xlu0 %v644, 64
    %v1791 = vpop.permute.xlu0 %1790
    %1792 = vrot.lane.b32.xlu0 %v649, 64
    %v1793 = vpop.permute.xlu0 %1792
    %1794 = vrot.lane.b32.xlu0 %v652, 64
    %v1795 = vpop.permute.xlu0 %1794
    %1796 = vrot.lane.b32.xlu0 %v657, 64
    %v1797 = vpop.permute.xlu0 %1796
    %1798 = vrot.lane.b32.xlu0 %v660, 64
    %v1799 = vpop.permute.xlu0 %1798
    %1800 = vrot.lane.b32.xlu0 %v665, 64
    %v1801 = vpop.permute.xlu0 %1800
    %1802 = vrot.lane.b32.xlu0 %v668, 64
    %v1803 = vpop.permute.xlu0 %1802
    %1804 = vrot.lane.b32.xlu0 %v673, 64
    %v1805 = vpop.permute.xlu0 %1804
    %1806 = vrot.lane.b32.xlu0 %v676, 64
    %v1807 = vpop.permute.xlu0 %1806
    %v1840 = vsel %vm188, %v1649, %v1745
    %v1841 = vsel %vm188, %v1651, %v1747
    %v1842 = vsel %vm188, %v1653, %v1749
    %v1843 = vsel %vm188, %v1655, %v1751
    %v1844 = vsel %vm188, %v1657, %v1753
    %v1845 = vsel %vm188, %v1659, %v1755
    %v1846 = vsel %vm188, %v1661, %v1757
    %v1847 = vsel %vm188, %v1663, %v1759
    %v1848 = vsel %vm188, %v1665, %v1761
    %v1849 = vsel %vm188, %v1667, %v1763
    %v1850 = vsel %vm188, %v1669, %v1765
    %v1851 = vsel %vm188, %v1671, %v1767
    %v1852 = vsel %vm188, %v1673, %v1769
    %v1853 = vsel %vm188, %v1675, %v1771
    %v1854 = vsel %vm188, %v1677, %v1773
    %v1855 = vsel %vm188, %v1679, %v1775
    %v1856 = vsel %vm188, %v1681, %v1777
    %v1857 = vsel %vm188, %v1683, %v1779
    %v1858 = vsel %vm188, %v1685, %v1781
    %v1859 = vsel %vm188, %v1687, %v1783
    %v1860 = vsel %vm188, %v1689, %v1785
    %v1861 = vsel %vm188, %v1691, %v1787
    %v1862 = vsel %vm188, %v1693, %v1789
    %v1863 = vsel %vm188, %v1695, %v1791
    %v1864 = vsel %vm188, %v1697, %v1793
    %v1865 = vsel %vm188, %v1699, %v1795
    %v1866 = vsel %vm188, %v1701, %v1797
    %v1867 = vsel %vm188, %v1703, %v1799
    %v1868 = vsel %vm188, %v1705, %v1801
    %v1869 = vsel %vm188, %v1707, %v1803
    %v1870 = vsel %vm188, %v1709, %v1805
    %v1871 = vsel %vm188, %v1711, %v1807
    %vm1872 = vcmask 785408
    %v1873 = vsel %vm1872, %v1840, 0.0
    %v1874 = vsel %vm1872, %v1841, 0.0
    %v1875 = vsel %vm1872, %v1842, 0.0
    %v1876 = vsel %vm1872, %v1843, 0.0
    %v1877 = vsel %vm1872, %v1844, 0.0
    %v1878 = vsel %vm1872, %v1845, 0.0
    %v1879 = vsel %vm1872, %v1846, 0.0
    %v1880 = vsel %vm1872, %v1847, 0.0
    %v1881 = vsel %vm1872, %v1848, 0.0
    %v1882 = vsel %vm1872, %v1849, 0.0
    %v1883 = vsel %vm1872, %v1850, 0.0
    %v1884 = vsel %vm1872, %v1851, 0.0
    %v1885 = vsel %vm1872, %v1852, 0.0
    %v1886 = vsel %vm1872, %v1853, 0.0
    %v1887 = vsel %vm1872, %v1854, 0.0
    %v1888 = vsel %vm1872, %v1855, 0.0
    %v1889 = vsel %vm1872, %v1856, 0.0
    %v1890 = vsel %vm1872, %v1857, 0.0
    %v1891 = vsel %vm1872, %v1858, 0.0
    %v1892 = vsel %vm1872, %v1859, 0.0
    %v1893 = vsel %vm1872, %v1860, 0.0
    %v1894 = vsel %vm1872, %v1861, 0.0
    %v1895 = vsel %vm1872, %v1862, 0.0
    %v1896 = vsel %vm1872, %v1863, 0.0
    %v1897 = vsel %vm1872, %v1864, 0.0
    %v1898 = vsel %vm1872, %v1865, 0.0
    %v1899 = vsel %vm1872, %v1866, 0.0
    %v1900 = vsel %vm1872, %v1867, 0.0
    %v1901 = vsel %vm1872, %v1868, 0.0
    %v1902 = vsel %vm1872, %v1869, 0.0
    %v1903 = vsel %vm1872, %v1870, 0.0
    %v1904 = vsel %vm1872, %v1871, 0.0
    %1905 = vst [vmem:[#allocation2] sm:$0xff] %v1873
    %1906 = vst [vmem:[#allocation2 + $0x8] sm:$0xff] %v1874
    %1907 = vst [vmem:[#allocation2 + $0x10] sm:$0xff] %v1875
    %1908 = vst [vmem:[#allocation2 + $0x18] sm:$0xff] %v1876
    %1909 = vst [vmem:[#allocation2 + $0x20] sm:$0xff] %v1877
    %1910 = vst [vmem:[#allocation2 + $0x28] sm:$0xff] %v1878
    %1911 = vst [vmem:[#allocation2 + $0x30] sm:$0xff] %v1879
    %1912 = vst [vmem:[#allocation2 + $0x38] sm:$0xff] %v1880
    %1913 = vst [vmem:[#allocation2 + $0x40] sm:$0xff] %v1881
    %1914 = vst [vmem:[#allocation2 + $0x48] sm:$0xff] %v1882
    %1915 = vst [vmem:[#allocation2 + $0x50] sm:$0xff] %v1883
    %1916 = vst [vmem:[#allocation2 + $0x58] sm:$0xff] %v1884
    %1917 = vst [vmem:[#allocation2 + $0x60] sm:$0xff] %v1885
    %1918 = vst [vmem:[#allocation2 + $0x68] sm:$0xff] %v1886
    %1919 = vst [vmem:[#allocation2 + $0x70] sm:$0xff] %v1887
    %1920 = vst [vmem:[#allocation2 + $0x78] sm:$0xff] %v1888
    %1921 = vst [vmem:[#allocation2 + $0x80] sm:$0xff] %v1889
    %1922 = vst [vmem:[#allocation2 + $0x88] sm:$0xff] %v1890
    %1923 = vst [vmem:[#allocation2 + $0x90] sm:$0xff] %v1891
    %1924 = vst [vmem:[#allocation2 + $0x98] sm:$0xff] %v1892
    %1925 = vst [vmem:[#allocation2 + $0xa0] sm:$0xff] %v1893
    %1926 = vst [vmem:[#allocation2 + $0xa8] sm:$0xff] %v1894
    %1927 = vst [vmem:[#allocation2 + $0xb0] sm:$0xff] %v1895
    %1928 = vst [vmem:[#allocation2 + $0xb8] sm:$0xff] %v1896
    %1929 = vst [vmem:[#allocation2 + $0xc0] sm:$0xff] %v1897
    %1930 = vst [vmem:[#allocation2 + $0xc8] sm:$0xff] %v1898
    %1931 = vst [vmem:[#allocation2 + $0xd0] sm:$0xff] %v1899
    %1932 = vst [vmem:[#allocation2 + $0xd8] sm:$0xff] %v1900
    %1933 = vst [vmem:[#allocation2 + $0xe0] sm:$0xff] %v1901
    %1934 = vst [vmem:[#allocation2 + $0xe8] sm:$0xff] %v1902
    %1935 = vst [vmem:[#allocation2 + $0xf0] sm:$0xff] %v1903
    %1936 = vst [vmem:[#allocation2 + $0xf8] sm:$0xff] %v1904
    // Predicated region
    $region42: #{tpu_custom_call.1} parent=1 // pred_check
      _
    $region43: #{tpu_custom_call.1} parent=1 // pred_check_branch
      %1938 = sbr.rel (0) target = $region45
    $region44: #{tpu_custom_call.1} parent=1 // pred_region
      %s1940 = ssub.s32 4096, 4096
      %1941 = vsyncadd [#allocation3], %s1940
      %s1942 = sshll.u32 [#allocation2], 4
      %s1943 = int_to_ptr.vmem [resolvable:$true] %s1942
      %1948 = dma.vmem_to_hbm [thread:$0]  %s1943, 4096, %s10, [#allocation3], 128, 128, 8
    $region45: #{tpu_custom_call.1} parent=1 // pred_fallthru
      _
    // Predicated region
    $region46: #{tpu_custom_call.1} parent=1 // pred_check
      _
    $region47: #{tpu_custom_call.1} parent=1 // pred_check_branch
      %1950 = sbr.rel (0) target = $region49
    $region48: #{tpu_custom_call.1} parent=1 // pred_region
      %1951 = dma.done [#allocation3], 4096
    $region49: #{tpu_custom_call.1} parent=1 // pred_fallthru
      _
    %1952 = vsyncpa [#allocation3], 1

</llo_original>
